<compile_context>
chip_gen: v7x
topology: tpu7x:2x2x1
jax: 0.10.0
libtpu: 0.0.40
codegen_flags: <defaults>
</compile_context>

<pallas_src>
import numpy as np
import jax
import jax.numpy as jnp
from jax.experimental import pallas as pl
from jax.experimental.pallas import tpu as pltpu


# ---------------------------------------------------------------------------
# Fused kernel: CIF + n_hat + FC layers + embedding mixing, one batch / step.
# ---------------------------------------------------------------------------
def _wavy_fused_kernel(len_ref, hs_ref, bert_ref, mask_ref,
                       w1_ref, b1_ref, w2_ref, b2_ref,
                       mix_ref, fc_ref, nhat_ref, ap_scr):
    # len_ref : SMEM (B,)    int32  clipped label lengths (scalar prefetch)
    # hs_ref  : VMEM (1,T,H) f32    w2v hidden states
    # bert_ref: VMEM (1,L,H) f32    BERT embeddings
    # mask_ref: VMEM (1,L,1) f32    Bernoulli(p) mixing mask
    # w1_ref  : VMEM (H,H)   bf16   FC1 weight, zero-padded last input row
    # b1_ref  : VMEM (1,H)   f32
    # w2_ref  : VMEM (H,H)   bf16
    # b2_ref  : VMEM (1,H)   f32
    # mix_ref : VMEM (1,L,H) f32    bert_mixing output
    # fc_ref  : VMEM (1,L,H) f32    fc_embeddings output
    # nhat_ref: VMEM (1,1,1) f32    per-batch (len - sum(alpha))^2
    # ap_scr  : VMEM (L,1)   f32    scratch: alpha'_k
    b = pl.program_id(0)
    H = hs_ref.shape[2]
    L = bert_ref.shape[1]
    Hm1 = H - 1

    # ---- alpha column only (no full (T,H) load), sigmoid computed once ----
    alpha = jax.nn.sigmoid(hs_ref[0, :, Hm1:H])          # (T, 1)
    asum = jnp.sum(alpha)
    label_len = len_ref[b].astype(jnp.float32)
    nhat_ref[...] = jnp.full((1, 1, 1), (label_len - asum) ** 2, jnp.float32)
    # eps guard: reference divides by the raw sigmoid sum; guard only protects
    # against a pathological ~0 denominator.
    scale = label_len / jnp.maximum(asum, 1e-6)
    ap_scr[...] = alpha[0:L, :] * scale                  # (L, 1) alpha'_k

    # ---- scalar-only integrate-and-fire scan (tiny vreg carries) ----------
    # Produces, per step k:
    #   w_k : coefficient of hs_k in s_a_k
    #   d_k : coefficient of hs_k in s_r_k
    #   F_k : cumulative fire count  (G_k = F_{k-1})
    # so that  s_a[k, :] = sum_j C[k, j] * hs[j, :]  with
    #   C[k, j] = d_j * [F_{k-1} == F_j]  for j < k,   C[k, k] = w_k.
    sub_iota = jax.lax.broadcasted_iota(jnp.int32, (L, 1), 0)
    lane_iota = jax.lax.broadcasted_iota(jnp.int32, (1, L), 1)

    def body(k, carry):
        a_r, f_prev, w_col, g_col, d_row, f_row = carry
        ap_k = ap_scr[pl.ds(k, 1), :]                    # (1, 1)
        a_a = ap_k + a_r
        fired = a_a >= 1.0
        firedf = fired.astype(jnp.float32)
        a_r_new = a_a - firedf                           # a_a (not fired) / a_a-1 (fired)
        w_k = jnp.where(fired, 1.0 - a_r, ap_k)
        d_k = jnp.where(fired, a_r_new, ap_k)
        f_new = f_prev + firedf
        w_col = jnp.where(sub_iota == k, w_k, w_col)     # (L, 1)
        g_col = jnp.where(sub_iota == k, f_prev, g_col)  # (L, 1)
        d_row = jnp.where(lane_iota == k, d_k, d_row)    # (1, L)
        f_row = jnp.where(lane_iota == k, f_new, f_row)  # (1, L)
        return a_r_new, f_new, w_col, g_col, d_row, f_row

    zero11 = jnp.zeros((1, 1), jnp.float32)
    init = (zero11, zero11,
            jnp.zeros((L, 1), jnp.float32), jnp.zeros((L, 1), jnp.float32),
            jnp.zeros((1, L), jnp.float32), jnp.zeros((1, L), jnp.float32))
    _, _, w_col, g_col, d_row, f_row = jax.lax.fori_loop(
        0, L, body, init, unroll=(True if L <= 32 else 8))

    # ---- feature-dim work as ONE MXU matmul: s_a = C @ hs[:L, :] -----------
    row_idx = jax.lax.broadcasted_iota(jnp.int32, (L, L), 0)   # k
    col_idx = jax.lax.broadcasted_iota(jnp.int32, (L, L), 1)   # j
    coef = jnp.where((col_idx < row_idx) & (g_col == f_row), d_row, 0.0)
    coef = coef + jnp.where(col_idx == row_idx, w_col, 0.0)    # (L, L)
    hs_rows = hs_ref[0, 0:L, :]                                # (L, H)
    # f32 matmul keeps the CIF combination at reference precision; the last
    # column (raw alpha logits) is multiplied by W1's zero-padded row below.
    s_a = jnp.dot(coef, hs_rows, preferred_element_type=jnp.float32)  # (L, H)

    # ---- FC1 -> ReLU -> FC2 (bf16 MXU operands, f32 accumulate) + mixing ---
    h1 = jnp.dot(s_a.astype(jnp.bfloat16), w1_ref[...],
                 preferred_element_type=jnp.float32) + b1_ref[...]
    h1 = jnp.maximum(h1, 0.0)
    fc = jnp.dot(h1.astype(jnp.bfloat16), w2_ref[...],
                 preferred_element_type=jnp.float32) + b2_ref[...]
    fc_ref[0] = fc                                             # dense (L,H) store
    mask = mask_ref[0]                                         # (L, 1)
    mix_ref[0] = (1.0 - mask) * fc + mask * bert_ref[0]        # dense (L,H) store


def fused_cif_fc_mix(hs, text_labels_length, bert_emb, mask,
                     W1p_bf16, b1, W2_bf16, b2):
    B, T, H = hs.shape
    L = bert_emb.shape[1]
    grid_spec = pltpu.PrefetchScalarGridSpec(
        num_scalar_prefetch=1,
        grid=(B,),
        in_specs=[
            pl.BlockSpec((1, T, H), lambda b, lens: (b, 0, 0)),   # hs
            pl.BlockSpec((1, L, H), lambda b, lens: (b, 0, 0)),   # bert
            pl.BlockSpec((1, L, 1), lambda b, lens: (b, 0, 0)),   # mask
            pl.BlockSpec((H, H),    lambda b, lens: (0, 0)),      # W1 (padded, bf16)
            pl.BlockSpec((1, H),    lambda b, lens: (0, 0)),      # b1
            pl.BlockSpec((H, H),    lambda b, lens: (0, 0)),      # W2 (bf16)
            pl.BlockSpec((1, H),    lambda b, lens: (0, 0)),      # b2
        ],
        out_specs=[
            pl.BlockSpec((1, L, H), lambda b, lens: (b, 0, 0)),   # bert_mixing
            pl.BlockSpec((1, L, H), lambda b, lens: (b, 0, 0)),   # fc_embeddings
            pl.BlockSpec((1, 1, 1), lambda b, lens: (b, 0, 0)),   # n_hat per batch
        ],
        scratch_shapes=[pltpu.VMEM((L, 1), jnp.float32)],
    )
    mix, fc, nhat = pl.pallas_call(
        _wavy_fused_kernel,
        out_shape=(
            jax.ShapeDtypeStruct((B, L, H), jnp.float32),
            jax.ShapeDtypeStruct((B, L, H), jnp.float32),
            jax.ShapeDtypeStruct((B, 1, 1), jnp.float32),
        ),
        grid_spec=grid_spec,
        compiler_params=pltpu.CompilerParams(
            # every grid step only touches its own output blocks -> safe to
            # shard across TensorCores (v7x megacore); no-op on v5e/v6e.
            dimension_semantics=("parallel",),
            # sized with headroom for v7x's 64 MiB VMEM; v5e/v6e have 128 MiB.
            vmem_limit_bytes=48 * 1024 * 1024,
        ),
    )(text_labels_length, hs, bert_emb, mask, W1p_bf16, b1, W2_bf16, b2)
    return mix, fc, nhat


# ---------------------------------------------------------------------------
# Forward wrapper mirroring WavyBert.forward (pretrained-model outputs are
# synthetic inputs).  Returns the same 5-tuple.
# ---------------------------------------------------------------------------
def wavy_bert_forward(w2v_hidden_states, bert_input_ids_length, bert_embeddings,
                      W1, b1, W2, b2, mix_key, p, max_label_length):
    B, T, H = w2v_hidden_states.shape
    L = max_label_length
    text_labels_length = jnp.minimum(
        bert_input_ids_length, L).astype(jnp.int32)
    # torch.bernoulli equivalent: drawn with the JAX PRNG in the wrapper (the
    # in-kernel TPU stateful PRNG has no CPU/interpret lowering, and only B*L
    # bits are needed).
    mask = jax.random.bernoulli(mix_key, p, (B, L, 1)).astype(jnp.float32)
    # Zero-pad W1 with one extra input row so the CIF result can be fed to FC1
    # as full H-wide rows (lane-aligned at the real H=768) with no masked
    # [:, :H-1] slice.  Cast MXU weight operands to bf16 once here.
    W1p = jnp.concatenate([W1, jnp.zeros((1, W1.shape[1]), W1.dtype)], axis=0)
    mix, fc, nhat = fused_cif_fc_mix(
        w2v_hidden_states, text_labels_length, bert_embeddings, mask,
        W1p.astype(jnp.bfloat16), b1, W2.astype(jnp.bfloat16), b2)
    n_hat = jnp.sum(nhat)
    # TODO(synk): w2v_loss is the CTC loss of the pretrained Wav2Vec2ForCTC;
    # not translatable without the pretrained model -> placeholder scalar.
    w2v_loss = jnp.float32(0.0)
    return mix, w2v_hidden_states, fc, n_hat, w2v_loss


# ---------------------------------------------------------------------------
# Numpy reference for the deterministic parts (CIF recurrence, FC, n_hat).
# ---------------------------------------------------------------------------
def _round_bf16(x):
    return np.asarray(
        jnp.asarray(np.asarray(x, np.float32)).astype(jnp.bfloat16)
        .astype(jnp.float32))


def _reference(hidden_states, lengths, L, W1, b1, W2, b2):
    hidden_states = np.asarray(hidden_states, np.float32)
    B, T, H = hidden_states.shape
    alpha = 1.0 / (1.0 + np.exp(-hidden_states[:, :, -1]))   # (B, T)
    asum = alpha.sum(1)
    ll = np.minimum(np.asarray(lengths), L).astype(np.float32)
    ap = alpha * (ll / asum)[:, None]
    hs = hidden_states[:, :, :-1]
    s_a = np.zeros((B, L, H - 1), np.float32)
    a_r_prev = np.zeros((B,), np.float32)
    s_r_prev = np.zeros((B, H - 1), np.float32)
    for k in range(L):
        a_a = ap[:, k] + a_r_prev
        nf = a_a < 1.0
        a_r_new = np.where(nf, a_a, ap[:, k] - (1.0 - a_r_prev))
        w = np.where(nf, ap[:, k], 1.0 - a_r_prev)
        s_a[:, k] = s_r_prev + w[:, None] * hs[:, k]
        s_r_prev = np.where(nf[:, None], s_a[:, k], a_r_new[:, None] * hs[:, k])
        a_r_prev = a_r_new
    n_hat = float(((ll - asum) ** 2).sum())
    # Mirror the kernel's bf16 MXU-operand rounding (accumulation stays f32).
    h1 = np.maximum(_round_bf16(s_a) @ _round_bf16(W1)
                    + np.asarray(b1, np.float32), 0.0)
    fc = _round_bf16(h1) @ _round_bf16(W2) + np.asarray(b2, np.float32)
    return s_a, fc, n_hat


if __name__ == "__main__":
    key = jax.random.PRNGKey(0)
    k1, k2, k3, k4, k5, k6, kmask = jax.random.split(key, 7)

    # Small, consistent shapes (real model: H=768+1 alpha column, L<=400).
    B, T, H = 2, 16, 33            # H-1 = 32 CIF feature dim
    bert_input_ids_length = jnp.array([8, 6], dtype=jnp.int32)
    max_label_length = int(min(int(jnp.max(bert_input_ids_length)), 400))  # 8
    L = max_label_length

    # Synthetic stand-ins for pretrained-model outputs.
    w2v_hidden_states = jax.random.normal(k1, (B, T, H), jnp.float32)
    bert_embeddings = jax.random.normal(k2, (B, L, H), jnp.float32)

    # Deterministic fully_connected_layer parameters.
    W1 = 0.05 * jax.random.normal(k3, (H - 1, H), jnp.float32)
    b1 = 0.01 * jax.random.normal(k4, (1, H), jnp.float32)
    W2 = 0.05 * jax.random.normal(k5, (H, H), jnp.float32)
    b2 = 0.01 * jax.random.normal(k6, (1, H), jnp.float32)

    p = 0.15

    outs = wavy_bert_forward(w2v_hidden_states, bert_input_ids_length,
                             bert_embeddings, W1, b1, W2, b2, kmask, p,
                             max_label_length)
    outs = jax.block_until_ready(outs)
    bert_mixing, hs_out, fc_embeddings, n_hat, w2v_loss = outs

    # Check the deterministic parts against the numpy reference.
    sa_ref, fc_ref, nhat_ref = _reference(
        w2v_hidden_states, bert_input_ids_length, L, W1, b1, W2, b2)
    np.testing.assert_allclose(np.asarray(fc_embeddings), fc_ref,
                               rtol=1e-2, atol=2e-3)
    np.testing.assert_allclose(float(n_hat), nhat_ref, rtol=1e-3, atol=1e-3)

    # Mixing path: reproduce the (deterministic) Bernoulli mask and check the
    # elementwise blend against the kernel's own fc output.
    mask_chk = np.asarray(jax.random.bernoulli(kmask, p, (B, L, 1)), np.float32)
    mix_chk = (1.0 - mask_chk) * np.asarray(fc_embeddings) \
        + mask_chk * np.asarray(bert_embeddings)
    np.testing.assert_allclose(np.asarray(bert_mixing), mix_chk,
                               rtol=1e-5, atol=1e-5)

    assert bert_mixing.shape == (B, L, H)
    assert fc_embeddings.shape == (B, L, H)
    assert np.all(np.isfinite(np.asarray(bert_mixing)))

    print("KERNEL_OK")
</pallas_src>

<mosaic_0001>
module attributes {stable_mosaic.version = 11 : i64} {
  func.func @_wavy_fused_kernel(%arg0: i32, %arg1: memref<2xi32, #tpu.memory_space<smem>>, %arg2: memref<1x16x33xf32, #tpu.memory_space<vmem>>, %arg3: memref<1x8x33xf32, #tpu.memory_space<vmem>>, %arg4: memref<1x8x1xf32, #tpu.memory_space<vmem>>, %arg5: memref<33x33xbf16, #tpu.memory_space<vmem>>, %arg6: memref<1x33xf32, #tpu.memory_space<vmem>>, %arg7: memref<33x33xbf16, #tpu.memory_space<vmem>>, %arg8: memref<1x33xf32, #tpu.memory_space<vmem>>, %arg9: memref<1x8x33xf32, #tpu.memory_space<vmem>>, %arg10: memref<1x8x33xf32, #tpu.memory_space<vmem>>, %arg11: memref<1x1x1xf32, #tpu.memory_space<vmem>>, %arg12: memref<8x1xf32, #tpu.memory_space<vmem>>) attributes {dimension_semantics = [#tpu.dimension_semantics<parallel>], iteration_bounds = array<i64: 2>, scalar_prefetch = 1 : i64, scratch_operands = 1 : i64, tpu.core_type = #tpu.core_type<tc>, window_params = [{transform_indices = @transform_0, window_bounds = array<i64: 1, 16, 33>}, {transform_indices = @transform_1, window_bounds = array<i64: 1, 8, 33>}, {transform_indices = @transform_2, window_bounds = array<i64: 1, 8, 1>}, {pipeline_mode = #tpu.pipeline_mode<synchronous>, transform_indices = @transform_3, window_bounds = array<i64: 33, 33>}, {pipeline_mode = #tpu.pipeline_mode<synchronous>, transform_indices = @transform_4, window_bounds = array<i64: 1, 33>}, {pipeline_mode = #tpu.pipeline_mode<synchronous>, transform_indices = @transform_5, window_bounds = array<i64: 33, 33>}, {pipeline_mode = #tpu.pipeline_mode<synchronous>, transform_indices = @transform_6, window_bounds = array<i64: 1, 33>}, {transform_indices = @transform_7, window_bounds = array<i64: 1, 8, 33>}, {transform_indices = @transform_8, window_bounds = array<i64: 1, 8, 33>}, {transform_indices = @transform_9, window_bounds = array<i64: 1, 1, 1>}]} {
    %c0 = arith.constant 0 : index
    %c0_0 = arith.constant 0 : index
    %c32 = arith.constant 32 : index
    %0 = vector.load %arg2[%c0, %c0_0, %c32] : memref<1x16x33xf32, #tpu.memory_space<vmem>>, vector<1x16x1xf32>
    %1 = vector.shape_cast %0 : vector<1x16x1xf32> to vector<16x1xf32>
    %2 = arith.negf %1 : vector<16x1xf32>
    %3 = math.exp %2 : vector<16x1xf32>
    %cst = arith.constant 1.000000e+00 : f32
    %4 = vector.broadcast %cst : f32 to vector<16x1xf32>
    %5 = arith.addf %4, %3 : vector<16x1xf32>
    %6 = arith.divf %4, %5 : vector<16x1xf32>
    %7 = vector.shape_cast %6 : vector<16x1xf32> to vector<1x16x1xf32>
    %cst_1 = arith.constant dense<0.000000e+00> : vector<1xf32>
    %8 = vector.multi_reduction <add>, %7, %cst_1 [1, 2] : vector<1x16x1xf32> to vector<1xf32>
    %9 = vector.shape_cast %8 : vector<1xf32> to vector<1x1x1xf32>
    %10 = vector.extract %9[0, 0, 0] : f32 from vector<1x1x1xf32>
    %11 = arith.index_cast %arg0 : i32 to index
    %12 = memref.load %arg1[%11] : memref<2xi32, #tpu.memory_space<smem>>
    %13 = arith.sitofp %12 : i32 to f32
    %14 = arith.subf %13, %10 : f32
    %15 = arith.mulf %14, %14 : f32
    %16 = vector.broadcast %15 : f32 to vector<1x1x1xf32>
    %c0_2 = arith.constant 0 : index
    %c0_3 = arith.constant 0 : index
    %c0_4 = arith.constant 0 : index
    %17 = vector.load %arg11[%c0_2, %c0_3, %c0_4] : memref<1x1x1xf32, #tpu.memory_space<vmem>>, vector<1x1x1xf32>
    tpu.vector_store %arg11[%c0_2, %c0_3, %c0_4], %16 {strides = array<i32>} : memref<1x1x1xf32, #tpu.memory_space<vmem>>, vector<1x1x1xf32>,
    %cst_5 = arith.constant 9.99999997E-7 : f32
    %18 = arith.maximumf %10, %cst_5 : f32
    %19 = arith.divf %13, %18 : f32
    %20 = vector.extract_strided_slice %6 {offsets = [0, 0], sizes = [8, 1], strides = [1, 1]} : vector<16x1xf32> to vector<8x1xf32>
    %21 = vector.broadcast %19 : f32 to vector<8x1xf32>
    %22 = arith.mulf %20, %21 : vector<8x1xf32>
    %c0_6 = arith.constant 0 : index
    %c0_7 = arith.constant 0 : index
    %23 = vector.load %arg12[%c0_6, %c0_7] : memref<8x1xf32, #tpu.memory_space<vmem>>, vector<8x1xf32>
    tpu.vector_store %arg12[%c0_6, %c0_7], %22 {strides = array<i32>} : memref<8x1xf32, #tpu.memory_space<vmem>>, vector<8x1xf32>,
    %24 = tpu.iota {dimensions = array<i32: 0>} : vector<8x1xi32>
    %25 = tpu.iota {dimensions = array<i32: 1>} : vector<1x8xi32>
    %cst_8 = arith.constant 0.000000e+00 : f32
    %26 = vector.broadcast %cst_8 : f32 to vector<1x1xf32>
    %cst_9 = arith.constant 0.000000e+00 : f32
    %27 = vector.broadcast %cst_9 : f32 to vector<8x1xf32>
    %cst_10 = arith.constant 0.000000e+00 : f32
    %28 = vector.broadcast %cst_10 : f32 to vector<8x1xf32>
    %cst_11 = arith.constant 0.000000e+00 : f32
    %29 = vector.broadcast %cst_11 : f32 to vector<1x8xf32>
    %cst_12 = arith.constant 0.000000e+00 : f32
    %30 = vector.broadcast %cst_12 : f32 to vector<1x8xf32>
    %c0_i32 = arith.constant 0 : i32
    %31 = arith.index_cast %c0_i32 : i32 to index
    %c0_13 = arith.constant 0 : index
    %32 = vector.load %arg12[%31, %c0_13] : memref<8x1xf32, #tpu.memory_space<vmem>>, vector<1x1xf32>
    %33 = arith.addf %32, %26 : vector<1x1xf32>
    %cst_14 = arith.constant 1.000000e+00 : f32
    %34 = vector.broadcast %cst_14 : f32 to vector<1x1xf32>
    %35 = arith.cmpf oge, %33, %34 : vector<1x1xf32>
    %36 = arith.extui %35 : vector<1x1xi1> to vector<1x1xi32>
    %37 = arith.sitofp %36 : vector<1x1xi32> to vector<1x1xf32>
    %38 = arith.subf %33, %37 : vector<1x1xf32>
    %cst_15 = arith.constant 1.000000e+00 : f32
    %39 = vector.broadcast %cst_15 : f32 to vector<1x1xf32>
    %40 = arith.subf %39, %26 : vector<1x1xf32>
    %41 = arith.select %35, %40, %32 : vector<1x1xi1>, vector<1x1xf32>
    %42 = arith.select %35, %38, %32 : vector<1x1xi1>, vector<1x1xf32>
    %43 = arith.addf %26, %37 : vector<1x1xf32>
    %44 = vector.broadcast %c0_i32 : i32 to vector<8x1xi32>
    %45 = arith.cmpi eq, %24, %44 : vector<8x1xi32>
    %46 = vector.shape_cast %41 : vector<1x1xf32> to vector<1x1xf32>
    %47 = vector.broadcast %46 : vector<1x1xf32> to vector<8x1xf32>
    %48 = arith.select %45, %47, %27 : vector<8x1xi1>, vector<8x1xf32>
    %49 = vector.broadcast %c0_i32 : i32 to vector<8x1xi32>
    %50 = arith.cmpi eq, %24, %49 : vector<8x1xi32>
    %51 = vector.shape_cast %26 : vector<1x1xf32> to vector<1x1xf32>
    %52 = vector.broadcast %51 : vector<1x1xf32> to vector<8x1xf32>
    %53 = arith.select %50, %52, %28 : vector<8x1xi1>, vector<8x1xf32>
    %54 = vector.broadcast %c0_i32 : i32 to vector<1x8xi32>
    %55 = arith.cmpi eq, %25, %54 : vector<1x8xi32>
    %56 = vector.shape_cast %42 : vector<1x1xf32> to vector<1x1xf32>
    %57 = vector.broadcast %56 : vector<1x1xf32> to vector<1x8xf32>
    %58 = arith.select %55, %57, %29 : vector<1x8xi1>, vector<1x8xf32>
    %59 = vector.broadcast %c0_i32 : i32 to vector<1x8xi32>
    %60 = arith.cmpi eq, %25, %59 : vector<1x8xi32>
    %61 = vector.shape_cast %43 : vector<1x1xf32> to vector<1x1xf32>
    %62 = vector.broadcast %61 : vector<1x1xf32> to vector<1x8xf32>
    %63 = arith.select %60, %62, %30 : vector<1x8xi1>, vector<1x8xf32>
    %c1_i32 = arith.constant 1 : i32
    %64 = arith.index_cast %c1_i32 : i32 to index
    %c0_16 = arith.constant 0 : index
    %65 = vector.load %arg12[%64, %c0_16] : memref<8x1xf32, #tpu.memory_space<vmem>>, vector<1x1xf32>
    %66 = arith.addf %65, %38 : vector<1x1xf32>
    %cst_17 = arith.constant 1.000000e+00 : f32
    %67 = vector.broadcast %cst_17 : f32 to vector<1x1xf32>
    %68 = arith.cmpf oge, %66, %67 : vector<1x1xf32>
    %69 = arith.extui %68 : vector<1x1xi1> to vector<1x1xi32>
    %70 = arith.sitofp %69 : vector<1x1xi32> to vector<1x1xf32>
    %71 = arith.subf %66, %70 : vector<1x1xf32>
    %cst_18 = arith.constant 1.000000e+00 : f32
    %72 = vector.broadcast %cst_18 : f32 to vector<1x1xf32>
    %73 = arith.subf %72, %38 : vector<1x1xf32>
    %74 = arith.select %68, %73, %65 : vector<1x1xi1>, vector<1x1xf32>
    %75 = arith.select %68, %71, %65 : vector<1x1xi1>, vector<1x1xf32>
    %76 = arith.addf %43, %70 : vector<1x1xf32>
    %77 = vector.broadcast %c1_i32 : i32 to vector<8x1xi32>
    %78 = arith.cmpi eq, %24, %77 : vector<8x1xi32>
    %79 = vector.shape_cast %74 : vector<1x1xf32> to vector<1x1xf32>
    %80 = vector.broadcast %79 : vector<1x1xf32> to vector<8x1xf32>
    %81 = arith.select %78, %80, %48 : vector<8x1xi1>, vector<8x1xf32>
    %82 = vector.broadcast %c1_i32 : i32 to vector<8x1xi32>
    %83 = arith.cmpi eq, %24, %82 : vector<8x1xi32>
    %84 = vector.shape_cast %43 : vector<1x1xf32> to vector<1x1xf32>
    %85 = vector.broadcast %84 : vector<1x1xf32> to vector<8x1xf32>
    %86 = arith.select %83, %85, %53 : vector<8x1xi1>, vector<8x1xf32>
    %87 = vector.broadcast %c1_i32 : i32 to vector<1x8xi32>
    %88 = arith.cmpi eq, %25, %87 : vector<1x8xi32>
    %89 = vector.shape_cast %75 : vector<1x1xf32> to vector<1x1xf32>
    %90 = vector.broadcast %89 : vector<1x1xf32> to vector<1x8xf32>
    %91 = arith.select %88, %90, %58 : vector<1x8xi1>, vector<1x8xf32>
    %92 = vector.broadcast %c1_i32 : i32 to vector<1x8xi32>
    %93 = arith.cmpi eq, %25, %92 : vector<1x8xi32>
    %94 = vector.shape_cast %76 : vector<1x1xf32> to vector<1x1xf32>
    %95 = vector.broadcast %94 : vector<1x1xf32> to vector<1x8xf32>
    %96 = arith.select %93, %95, %63 : vector<1x8xi1>, vector<1x8xf32>
    %c2_i32 = arith.constant 2 : i32
    %97 = arith.index_cast %c2_i32 : i32 to index
    %c0_19 = arith.constant 0 : index
    %98 = vector.load %arg12[%97, %c0_19] : memref<8x1xf32, #tpu.memory_space<vmem>>, vector<1x1xf32>
    %99 = arith.addf %98, %71 : vector<1x1xf32>
    %cst_20 = arith.constant 1.000000e+00 : f32
    %100 = vector.broadcast %cst_20 : f32 to vector<1x1xf32>
    %101 = arith.cmpf oge, %99, %100 : vector<1x1xf32>
    %102 = arith.extui %101 : vector<1x1xi1> to vector<1x1xi32>
    %103 = arith.sitofp %102 : vector<1x1xi32> to vector<1x1xf32>
    %104 = arith.subf %99, %103 : vector<1x1xf32>
    %cst_21 = arith.constant 1.000000e+00 : f32
    %105 = vector.broadcast %cst_21 : f32 to vector<1x1xf32>
    %106 = arith.subf %105, %71 : vector<1x1xf32>
    %107 = arith.select %101, %106, %98 : vector<1x1xi1>, vector<1x1xf32>
    %108 = arith.select %101, %104, %98 : vector<1x1xi1>, vector<1x1xf32>
    %109 = arith.addf %76, %103 : vector<1x1xf32>
    %110 = vector.broadcast %c2_i32 : i32 to vector<8x1xi32>
    %111 = arith.cmpi eq, %24, %110 : vector<8x1xi32>
    %112 = vector.shape_cast %107 : vector<1x1xf32> to vector<1x1xf32>
    %113 = vector.broadcast %112 : vector<1x1xf32> to vector<8x1xf32>
    %114 = arith.select %111, %113, %81 : vector<8x1xi1>, vector<8x1xf32>
    %115 = vector.broadcast %c2_i32 : i32 to vector<8x1xi32>
    %116 = arith.cmpi eq, %24, %115 : vector<8x1xi32>
    %117 = vector.shape_cast %76 : vector<1x1xf32> to vector<1x1xf32>
    %118 = vector.broadcast %117 : vector<1x1xf32> to vector<8x1xf32>
    %119 = arith.select %116, %118, %86 : vector<8x1xi1>, vector<8x1xf32>
    %120 = vector.broadcast %c2_i32 : i32 to vector<1x8xi32>
    %121 = arith.cmpi eq, %25, %120 : vector<1x8xi32>
    %122 = vector.shape_cast %108 : vector<1x1xf32> to vector<1x1xf32>
    %123 = vector.broadcast %122 : vector<1x1xf32> to vector<1x8xf32>
    %124 = arith.select %121, %123, %91 : vector<1x8xi1>, vector<1x8xf32>
    %125 = vector.broadcast %c2_i32 : i32 to vector<1x8xi32>
    %126 = arith.cmpi eq, %25, %125 : vector<1x8xi32>
    %127 = vector.shape_cast %109 : vector<1x1xf32> to vector<1x1xf32>
    %128 = vector.broadcast %127 : vector<1x1xf32> to vector<1x8xf32>
    %129 = arith.select %126, %128, %96 : vector<1x8xi1>, vector<1x8xf32>
    %c3_i32 = arith.constant 3 : i32
    %130 = arith.index_cast %c3_i32 : i32 to index
    %c0_22 = arith.constant 0 : index
    %131 = vector.load %arg12[%130, %c0_22] : memref<8x1xf32, #tpu.memory_space<vmem>>, vector<1x1xf32>
    %132 = arith.addf %131, %104 : vector<1x1xf32>
    %cst_23 = arith.constant 1.000000e+00 : f32
    %133 = vector.broadcast %cst_23 : f32 to vector<1x1xf32>
    %134 = arith.cmpf oge, %132, %133 : vector<1x1xf32>
    %135 = arith.extui %134 : vector<1x1xi1> to vector<1x1xi32>
    %136 = arith.sitofp %135 : vector<1x1xi32> to vector<1x1xf32>
    %137 = arith.subf %132, %136 : vector<1x1xf32>
    %cst_24 = arith.constant 1.000000e+00 : f32
    %138 = vector.broadcast %cst_24 : f32 to vector<1x1xf32>
    %139 = arith.subf %138, %104 : vector<1x1xf32>
    %140 = arith.select %134, %139, %131 : vector<1x1xi1>, vector<1x1xf32>
    %141 = arith.select %134, %137, %131 : vector<1x1xi1>, vector<1x1xf32>
    %142 = arith.addf %109, %136 : vector<1x1xf32>
    %143 = vector.broadcast %c3_i32 : i32 to vector<8x1xi32>
    %144 = arith.cmpi eq, %24, %143 : vector<8x1xi32>
    %145 = vector.shape_cast %140 : vector<1x1xf32> to vector<1x1xf32>
    %146 = vector.broadcast %145 : vector<1x1xf32> to vector<8x1xf32>
    %147 = arith.select %144, %146, %114 : vector<8x1xi1>, vector<8x1xf32>
    %148 = vector.broadcast %c3_i32 : i32 to vector<8x1xi32>
    %149 = arith.cmpi eq, %24, %148 : vector<8x1xi32>
    %150 = vector.shape_cast %109 : vector<1x1xf32> to vector<1x1xf32>
    %151 = vector.broadcast %150 : vector<1x1xf32> to vector<8x1xf32>
    %152 = arith.select %149, %151, %119 : vector<8x1xi1>, vector<8x1xf32>
    %153 = vector.broadcast %c3_i32 : i32 to vector<1x8xi32>
    %154 = arith.cmpi eq, %25, %153 : vector<1x8xi32>
    %155 = vector.shape_cast %141 : vector<1x1xf32> to vector<1x1xf32>
    %156 = vector.broadcast %155 : vector<1x1xf32> to vector<1x8xf32>
    %157 = arith.select %154, %156, %124 : vector<1x8xi1>, vector<1x8xf32>
    %158 = vector.broadcast %c3_i32 : i32 to vector<1x8xi32>
    %159 = arith.cmpi eq, %25, %158 : vector<1x8xi32>
    %160 = vector.shape_cast %142 : vector<1x1xf32> to vector<1x1xf32>
    %161 = vector.broadcast %160 : vector<1x1xf32> to vector<1x8xf32>
    %162 = arith.select %159, %161, %129 : vector<1x8xi1>, vector<1x8xf32>
    %c4_i32 = arith.constant 4 : i32
    %163 = arith.index_cast %c4_i32 : i32 to index
    %c0_25 = arith.constant 0 : index
    %164 = vector.load %arg12[%163, %c0_25] : memref<8x1xf32, #tpu.memory_space<vmem>>, vector<1x1xf32>
    %165 = arith.addf %164, %137 : vector<1x1xf32>
    %cst_26 = arith.constant 1.000000e+00 : f32
    %166 = vector.broadcast %cst_26 : f32 to vector<1x1xf32>
    %167 = arith.cmpf oge, %165, %166 : vector<1x1xf32>
    %168 = arith.extui %167 : vector<1x1xi1> to vector<1x1xi32>
    %169 = arith.sitofp %168 : vector<1x1xi32> to vector<1x1xf32>
    %170 = arith.subf %165, %169 : vector<1x1xf32>
    %cst_27 = arith.constant 1.000000e+00 : f32
    %171 = vector.broadcast %cst_27 : f32 to vector<1x1xf32>
    %172 = arith.subf %171, %137 : vector<1x1xf32>
    %173 = arith.select %167, %172, %164 : vector<1x1xi1>, vector<1x1xf32>
    %174 = arith.select %167, %170, %164 : vector<1x1xi1>, vector<1x1xf32>
    %175 = arith.addf %142, %169 : vector<1x1xf32>
    %176 = vector.broadcast %c4_i32 : i32 to vector<8x1xi32>
    %177 = arith.cmpi eq, %24, %176 : vector<8x1xi32>
    %178 = vector.shape_cast %173 : vector<1x1xf32> to vector<1x1xf32>
    %179 = vector.broadcast %178 : vector<1x1xf32> to vector<8x1xf32>
    %180 = arith.select %177, %179, %147 : vector<8x1xi1>, vector<8x1xf32>
    %181 = vector.broadcast %c4_i32 : i32 to vector<8x1xi32>
    %182 = arith.cmpi eq, %24, %181 : vector<8x1xi32>
    %183 = vector.shape_cast %142 : vector<1x1xf32> to vector<1x1xf32>
    %184 = vector.broadcast %183 : vector<1x1xf32> to vector<8x1xf32>
    %185 = arith.select %182, %184, %152 : vector<8x1xi1>, vector<8x1xf32>
    %186 = vector.broadcast %c4_i32 : i32 to vector<1x8xi32>
    %187 = arith.cmpi eq, %25, %186 : vector<1x8xi32>
    %188 = vector.shape_cast %174 : vector<1x1xf32> to vector<1x1xf32>
    %189 = vector.broadcast %188 : vector<1x1xf32> to vector<1x8xf32>
    %190 = arith.select %187, %189, %157 : vector<1x8xi1>, vector<1x8xf32>
    %191 = vector.broadcast %c4_i32 : i32 to vector<1x8xi32>
    %192 = arith.cmpi eq, %25, %191 : vector<1x8xi32>
    %193 = vector.shape_cast %175 : vector<1x1xf32> to vector<1x1xf32>
    %194 = vector.broadcast %193 : vector<1x1xf32> to vector<1x8xf32>
    %195 = arith.select %192, %194, %162 : vector<1x8xi1>, vector<1x8xf32>
    %c5_i32 = arith.constant 5 : i32
    %196 = arith.index_cast %c5_i32 : i32 to index
    %c0_28 = arith.constant 0 : index
    %197 = vector.load %arg12[%196, %c0_28] : memref<8x1xf32, #tpu.memory_space<vmem>>, vector<1x1xf32>
    %198 = arith.addf %197, %170 : vector<1x1xf32>
    %cst_29 = arith.constant 1.000000e+00 : f32
    %199 = vector.broadcast %cst_29 : f32 to vector<1x1xf32>
    %200 = arith.cmpf oge, %198, %199 : vector<1x1xf32>
    %201 = arith.extui %200 : vector<1x1xi1> to vector<1x1xi32>
    %202 = arith.sitofp %201 : vector<1x1xi32> to vector<1x1xf32>
    %203 = arith.subf %198, %202 : vector<1x1xf32>
    %cst_30 = arith.constant 1.000000e+00 : f32
    %204 = vector.broadcast %cst_30 : f32 to vector<1x1xf32>
    %205 = arith.subf %204, %170 : vector<1x1xf32>
    %206 = arith.select %200, %205, %197 : vector<1x1xi1>, vector<1x1xf32>
    %207 = arith.select %200, %203, %197 : vector<1x1xi1>, vector<1x1xf32>
    %208 = arith.addf %175, %202 : vector<1x1xf32>
    %209 = vector.broadcast %c5_i32 : i32 to vector<8x1xi32>
    %210 = arith.cmpi eq, %24, %209 : vector<8x1xi32>
    %211 = vector.shape_cast %206 : vector<1x1xf32> to vector<1x1xf32>
    %212 = vector.broadcast %211 : vector<1x1xf32> to vector<8x1xf32>
    %213 = arith.select %210, %212, %180 : vector<8x1xi1>, vector<8x1xf32>
    %214 = vector.broadcast %c5_i32 : i32 to vector<8x1xi32>
    %215 = arith.cmpi eq, %24, %214 : vector<8x1xi32>
    %216 = vector.shape_cast %175 : vector<1x1xf32> to vector<1x1xf32>
    %217 = vector.broadcast %216 : vector<1x1xf32> to vector<8x1xf32>
    %218 = arith.select %215, %217, %185 : vector<8x1xi1>, vector<8x1xf32>
    %219 = vector.broadcast %c5_i32 : i32 to vector<1x8xi32>
    %220 = arith.cmpi eq, %25, %219 : vector<1x8xi32>
    %221 = vector.shape_cast %207 : vector<1x1xf32> to vector<1x1xf32>
    %222 = vector.broadcast %221 : vector<1x1xf32> to vector<1x8xf32>
    %223 = arith.select %220, %222, %190 : vector<1x8xi1>, vector<1x8xf32>
    %224 = vector.broadcast %c5_i32 : i32 to vector<1x8xi32>
    %225 = arith.cmpi eq, %25, %224 : vector<1x8xi32>
    %226 = vector.shape_cast %208 : vector<1x1xf32> to vector<1x1xf32>
    %227 = vector.broadcast %226 : vector<1x1xf32> to vector<1x8xf32>
    %228 = arith.select %225, %227, %195 : vector<1x8xi1>, vector<1x8xf32>
    %c6_i32 = arith.constant 6 : i32
    %229 = arith.index_cast %c6_i32 : i32 to index
    %c0_31 = arith.constant 0 : index
    %230 = vector.load %arg12[%229, %c0_31] : memref<8x1xf32, #tpu.memory_space<vmem>>, vector<1x1xf32>
    %231 = arith.addf %230, %203 : vector<1x1xf32>
    %cst_32 = arith.constant 1.000000e+00 : f32
    %232 = vector.broadcast %cst_32 : f32 to vector<1x1xf32>
    %233 = arith.cmpf oge, %231, %232 : vector<1x1xf32>
    %234 = arith.extui %233 : vector<1x1xi1> to vector<1x1xi32>
    %235 = arith.sitofp %234 : vector<1x1xi32> to vector<1x1xf32>
    %236 = arith.subf %231, %235 : vector<1x1xf32>
    %cst_33 = arith.constant 1.000000e+00 : f32
    %237 = vector.broadcast %cst_33 : f32 to vector<1x1xf32>
    %238 = arith.subf %237, %203 : vector<1x1xf32>
    %239 = arith.select %233, %238, %230 : vector<1x1xi1>, vector<1x1xf32>
    %240 = arith.select %233, %236, %230 : vector<1x1xi1>, vector<1x1xf32>
    %241 = arith.addf %208, %235 : vector<1x1xf32>
    %242 = vector.broadcast %c6_i32 : i32 to vector<8x1xi32>
    %243 = arith.cmpi eq, %24, %242 : vector<8x1xi32>
    %244 = vector.shape_cast %239 : vector<1x1xf32> to vector<1x1xf32>
    %245 = vector.broadcast %244 : vector<1x1xf32> to vector<8x1xf32>
    %246 = arith.select %243, %245, %213 : vector<8x1xi1>, vector<8x1xf32>
    %247 = vector.broadcast %c6_i32 : i32 to vector<8x1xi32>
    %248 = arith.cmpi eq, %24, %247 : vector<8x1xi32>
    %249 = vector.shape_cast %208 : vector<1x1xf32> to vector<1x1xf32>
    %250 = vector.broadcast %249 : vector<1x1xf32> to vector<8x1xf32>
    %251 = arith.select %248, %250, %218 : vector<8x1xi1>, vector<8x1xf32>
    %252 = vector.broadcast %c6_i32 : i32 to vector<1x8xi32>
    %253 = arith.cmpi eq, %25, %252 : vector<1x8xi32>
    %254 = vector.shape_cast %240 : vector<1x1xf32> to vector<1x1xf32>
    %255 = vector.broadcast %254 : vector<1x1xf32> to vector<1x8xf32>
    %256 = arith.select %253, %255, %223 : vector<1x8xi1>, vector<1x8xf32>
    %257 = vector.broadcast %c6_i32 : i32 to vector<1x8xi32>
    %258 = arith.cmpi eq, %25, %257 : vector<1x8xi32>
    %259 = vector.shape_cast %241 : vector<1x1xf32> to vector<1x1xf32>
    %260 = vector.broadcast %259 : vector<1x1xf32> to vector<1x8xf32>
    %261 = arith.select %258, %260, %228 : vector<1x8xi1>, vector<1x8xf32>
    %c7_i32 = arith.constant 7 : i32
    %262 = arith.index_cast %c7_i32 : i32 to index
    %c0_34 = arith.constant 0 : index
    %263 = vector.load %arg12[%262, %c0_34] : memref<8x1xf32, #tpu.memory_space<vmem>>, vector<1x1xf32>
    %264 = arith.addf %263, %236 : vector<1x1xf32>
    %cst_35 = arith.constant 1.000000e+00 : f32
    %265 = vector.broadcast %cst_35 : f32 to vector<1x1xf32>
    %266 = arith.cmpf oge, %264, %265 : vector<1x1xf32>
    %267 = arith.extui %266 : vector<1x1xi1> to vector<1x1xi32>
    %268 = arith.sitofp %267 : vector<1x1xi32> to vector<1x1xf32>
    %269 = arith.subf %264, %268 : vector<1x1xf32>
    %cst_36 = arith.constant 1.000000e+00 : f32
    %270 = vector.broadcast %cst_36 : f32 to vector<1x1xf32>
    %271 = arith.subf %270, %236 : vector<1x1xf32>
    %272 = arith.select %266, %271, %263 : vector<1x1xi1>, vector<1x1xf32>
    %273 = arith.select %266, %269, %263 : vector<1x1xi1>, vector<1x1xf32>
    %274 = arith.addf %241, %268 : vector<1x1xf32>
    %275 = vector.broadcast %c7_i32 : i32 to vector<8x1xi32>
    %276 = arith.cmpi eq, %24, %275 : vector<8x1xi32>
    %277 = vector.shape_cast %272 : vector<1x1xf32> to vector<1x1xf32>
    %278 = vector.broadcast %277 : vector<1x1xf32> to vector<8x1xf32>
    %279 = arith.select %276, %278, %246 : vector<8x1xi1>, vector<8x1xf32>
    %280 = vector.broadcast %c7_i32 : i32 to vector<8x1xi32>
    %281 = arith.cmpi eq, %24, %280 : vector<8x1xi32>
    %282 = vector.shape_cast %241 : vector<1x1xf32> to vector<1x1xf32>
    %283 = vector.broadcast %282 : vector<1x1xf32> to vector<8x1xf32>
    %284 = arith.select %281, %283, %251 : vector<8x1xi1>, vector<8x1xf32>
    %285 = vector.broadcast %c7_i32 : i32 to vector<1x8xi32>
    %286 = arith.cmpi eq, %25, %285 : vector<1x8xi32>
    %287 = vector.shape_cast %273 : vector<1x1xf32> to vector<1x1xf32>
    %288 = vector.broadcast %287 : vector<1x1xf32> to vector<1x8xf32>
    %289 = arith.select %286, %288, %256 : vector<1x8xi1>, vector<1x8xf32>
    %290 = vector.broadcast %c7_i32 : i32 to vector<1x8xi32>
    %291 = arith.cmpi eq, %25, %290 : vector<1x8xi32>
    %292 = vector.shape_cast %274 : vector<1x1xf32> to vector<1x1xf32>
    %293 = vector.broadcast %292 : vector<1x1xf32> to vector<1x8xf32>
    %294 = arith.select %291, %293, %261 : vector<1x8xi1>, vector<1x8xf32>
    %c8_i32 = arith.constant 8 : i32
    %295 = tpu.iota {dimensions = array<i32: 0>} : vector<8x8xi32>
    %296 = tpu.iota {dimensions = array<i32: 1>} : vector<8x8xi32>
    %297 = arith.cmpi slt, %296, %295 : vector<8x8xi32>
    %298 = vector.broadcast %284 : vector<8x1xf32> to vector<8x8xf32>
    %299 = vector.broadcast %294 : vector<1x8xf32> to vector<8x8xf32>
    %300 = arith.cmpf oeq, %298, %299 : vector<8x8xf32>
    %301 = arith.andi %297, %300 : vector<8x8xi1>
    %cst_37 = arith.constant 0.000000e+00 : f32
    %302 = vector.shape_cast %289 : vector<1x8xf32> to vector<1x8xf32>
    %303 = vector.broadcast %302 : vector<1x8xf32> to vector<8x8xf32>
    %304 = vector.broadcast %cst_37 : f32 to vector<8x8xf32>
    %305 = arith.select %301, %303, %304 : vector<8x8xi1>, vector<8x8xf32>
    %306 = arith.cmpi eq, %296, %295 : vector<8x8xi32>
    %cst_38 = arith.constant 0.000000e+00 : f32
    %307 = vector.shape_cast %279 : vector<8x1xf32> to vector<8x1xf32>
    %308 = vector.broadcast %307 : vector<8x1xf32> to vector<8x8xf32>
    %309 = vector.broadcast %cst_38 : f32 to vector<8x8xf32>
    %310 = arith.select %306, %308, %309 : vector<8x8xi1>, vector<8x8xf32>
    %311 = arith.addf %305, %310 : vector<8x8xf32>
    %c0_39 = arith.constant 0 : index
    %c0_40 = arith.constant 0 : index
    %c0_41 = arith.constant 0 : index
    %312 = vector.load %arg2[%c0_39, %c0_40, %c0_41] : memref<1x16x33xf32, #tpu.memory_space<vmem>>, vector<1x8x33xf32>
    %313 = vector.shape_cast %312 : vector<1x8x33xf32> to vector<8x33xf32>
    %cst_42 = arith.constant dense<0.000000e+00> : vector<8x33xf32>
    %314 = tpu.matmul %311, %313, %cst_42 {dimension_numbers = #tpu.dot_dimension_numbers<[1], [0], [0], [1], [0, 0, 1, 1], [], []>} : vector<8x8xf32>, vector<8x33xf32>, vector<8x33xf32> -> vector<8x33xf32>
    %315 = arith.truncf %314 : vector<8x33xf32> to vector<8x33xbf16>
    %c0_43 = arith.constant 0 : index
    %c0_44 = arith.constant 0 : index
    %316 = vector.load %arg5[%c0_43, %c0_44] : memref<33x33xbf16, #tpu.memory_space<vmem>>, vector<33x33xbf16>
    %cst_45 = arith.constant dense<0.000000e+00> : vector<8x33xf32>
    %317 = tpu.matmul %315, %316, %cst_45 {dimension_numbers = #tpu.dot_dimension_numbers<[1], [0], [0], [1], [0, 0, 1, 1], [], []>} : vector<8x33xbf16>, vector<33x33xbf16>, vector<8x33xf32> -> vector<8x33xf32>
    %c0_46 = arith.constant 0 : index
    %c0_47 = arith.constant 0 : index
    %318 = vector.load %arg6[%c0_46, %c0_47] : memref<1x33xf32, #tpu.memory_space<vmem>>, vector<1x33xf32>
    %319 = vector.broadcast %318 : vector<1x33xf32> to vector<8x33xf32>
    %320 = arith.addf %317, %319 : vector<8x33xf32>
    %cst_48 = arith.constant 0.000000e+00 : f32
    %321 = vector.broadcast %cst_48 : f32 to vector<8x33xf32>
    %322 = arith.maximumf %320, %321 : vector<8x33xf32>
    %323 = arith.truncf %322 : vector<8x33xf32> to vector<8x33xbf16>
    %c0_49 = arith.constant 0 : index
    %c0_50 = arith.constant 0 : index
    %324 = vector.load %arg7[%c0_49, %c0_50] : memref<33x33xbf16, #tpu.memory_space<vmem>>, vector<33x33xbf16>
    %cst_51 = arith.constant dense<0.000000e+00> : vector<8x33xf32>
    %325 = tpu.matmul %323, %324, %cst_51 {dimension_numbers = #tpu.dot_dimension_numbers<[1], [0], [0], [1], [0, 0, 1, 1], [], []>} : vector<8x33xbf16>, vector<33x33xbf16>, vector<8x33xf32> -> vector<8x33xf32>
    %c0_52 = arith.constant 0 : index
    %c0_53 = arith.constant 0 : index
    %326 = vector.load %arg8[%c0_52, %c0_53] : memref<1x33xf32, #tpu.memory_space<vmem>>, vector<1x33xf32>
    %327 = vector.broadcast %326 : vector<1x33xf32> to vector<8x33xf32>
    %328 = arith.addf %325, %327 : vector<8x33xf32>
    %c0_54 = arith.constant 0 : index
    %c0_55 = arith.constant 0 : index
    %c0_56 = arith.constant 0 : index
    %329 = vector.load %arg10[%c0_54, %c0_55, %c0_56] : memref<1x8x33xf32, #tpu.memory_space<vmem>>, vector<1x8x33xf32>
    %330 = vector.shape_cast %329 : vector<1x8x33xf32> to vector<8x33xf32>
    %331 = vector.shape_cast %328 : vector<8x33xf32> to vector<1x8x33xf32>
    tpu.vector_store %arg10[%c0_54, %c0_55, %c0_56], %331 {strides = array<i32>} : memref<1x8x33xf32, #tpu.memory_space<vmem>>, vector<1x8x33xf32>,
    %c0_57 = arith.constant 0 : index
    %c0_58 = arith.constant 0 : index
    %c0_59 = arith.constant 0 : index
    %332 = vector.load %arg4[%c0_57, %c0_58, %c0_59] : memref<1x8x1xf32, #tpu.memory_space<vmem>>, vector<1x8x1xf32>
    %333 = vector.shape_cast %332 : vector<1x8x1xf32> to vector<8x1xf32>
    %cst_60 = arith.constant 1.000000e+00 : f32
    %334 = vector.broadcast %cst_60 : f32 to vector<8x1xf32>
    %335 = arith.subf %334, %333 : vector<8x1xf32>
    %336 = vector.broadcast %335 : vector<8x1xf32> to vector<8x33xf32>
    %337 = arith.mulf %336, %328 : vector<8x33xf32>
    %c0_61 = arith.constant 0 : index
    %c0_62 = arith.constant 0 : index
    %c0_63 = arith.constant 0 : index
    %338 = vector.load %arg3[%c0_61, %c0_62, %c0_63] : memref<1x8x33xf32, #tpu.memory_space<vmem>>, vector<1x8x33xf32>
    %339 = vector.shape_cast %338 : vector<1x8x33xf32> to vector<8x33xf32>
    %340 = vector.broadcast %333 : vector<8x1xf32> to vector<8x33xf32>
    %341 = arith.mulf %340, %339 : vector<8x33xf32>
    %342 = arith.addf %337, %341 : vector<8x33xf32>
    %c0_64 = arith.constant 0 : index
    %c0_65 = arith.constant 0 : index
    %c0_66 = arith.constant 0 : index
    %343 = vector.load %arg9[%c0_64, %c0_65, %c0_66] : memref<1x8x33xf32, #tpu.memory_space<vmem>>, vector<1x8x33xf32>
    %344 = vector.shape_cast %343 : vector<1x8x33xf32> to vector<8x33xf32>
    %345 = vector.shape_cast %342 : vector<8x33xf32> to vector<1x8x33xf32>
    tpu.vector_store %arg9[%c0_64, %c0_65, %c0_66], %345 {strides = array<i32>} : memref<1x8x33xf32, #tpu.memory_space<vmem>>, vector<1x8x33xf32>,
    return
  }
  func.func @transform_0(%arg0: i32, %arg1: memref<2xi32, #tpu.memory_space<smem>>) -> (i32, i32, i32) {
    %c0_i32 = arith.constant 0 : i32
    %c0_i32_0 = arith.constant 0 : i32
    %c0_i32_1 = arith.constant 0 : i32
    return %arg0, %c0_i32, %c0_i32_0 : i32, i32, i32
  }
  func.func @transform_1(%arg0: i32, %arg1: memref<2xi32, #tpu.memory_space<smem>>) -> (i32, i32, i32) {
    %c0_i32 = arith.constant 0 : i32
    %c0_i32_0 = arith.constant 0 : i32
    %c0_i32_1 = arith.constant 0 : i32
    return %arg0, %c0_i32, %c0_i32_0 : i32, i32, i32
  }
  func.func @transform_2(%arg0: i32, %arg1: memref<2xi32, #tpu.memory_space<smem>>) -> (i32, i32, i32) {
    %c0_i32 = arith.constant 0 : i32
    %c0_i32_0 = arith.constant 0 : i32
    %c0_i32_1 = arith.constant 0 : i32
    return %arg0, %c0_i32, %c0_i32_0 : i32, i32, i32
  }
  func.func @transform_3(%arg0: i32, %arg1: memref<2xi32, #tpu.memory_space<smem>>) -> (i32, i32) {
    %c0_i32 = arith.constant 0 : i32
    %c0_i32_0 = arith.constant 0 : i32
    %c0_i32_1 = arith.constant 0 : i32
    return %c0_i32, %c0_i32_0 : i32, i32
  }
  func.func @transform_4(%arg0: i32, %arg1: memref<2xi32, #tpu.memory_space<smem>>) -> (i32, i32) {
    %c0_i32 = arith.constant 0 : i32
    %c0_i32_0 = arith.constant 0 : i32
    %c0_i32_1 = arith.constant 0 : i32
    return %c0_i32, %c0_i32_0 : i32, i32
  }
  func.func @transform_5(%arg0: i32, %arg1: memref<2xi32, #tpu.memory_space<smem>>) -> (i32, i32) {
    %c0_i32 = arith.constant 0 : i32
    %c0_i32_0 = arith.constant 0 : i32
    %c0_i32_1 = arith.constant 0 : i32
    return %c0_i32, %c0_i32_0 : i32, i32
  }
  func.func @transform_6(%arg0: i32, %arg1: memref<2xi32, #tpu.memory_space<smem>>) -> (i32, i32) {
    %c0_i32 = arith.constant 0 : i32
    %c0_i32_0 = arith.constant 0 : i32
    %c0_i32_1 = arith.constant 0 : i32
    return %c0_i32, %c0_i32_0 : i32, i32
  }
  func.func @transform_7(%arg0: i32, %arg1: memref<2xi32, #tpu.memory_space<smem>>) -> (i32, i32, i32) {
    %c0_i32 = arith.constant 0 : i32
    %c0_i32_0 = arith.constant 0 : i32
    %c0_i32_1 = arith.constant 0 : i32
    return %arg0, %c0_i32, %c0_i32_0 : i32, i32, i32
  }
  func.func @transform_8(%arg0: i32, %arg1: memref<2xi32, #tpu.memory_space<smem>>) -> (i32, i32, i32) {
    %c0_i32 = arith.constant 0 : i32
    %c0_i32_0 = arith.constant 0 : i32
    %c0_i32_1 = arith.constant 0 : i32
    return %arg0, %c0_i32, %c0_i32_0 : i32, i32, i32
  }
  func.func @transform_9(%arg0: i32, %arg1: memref<2xi32, #tpu.memory_space<smem>>) -> (i32, i32, i32) {
    %c0_i32 = arith.constant 0 : i32
    %c0_i32_0 = arith.constant 0 : i32
    %c0_i32_1 = arith.constant 0 : i32
    return %arg0, %c0_i32, %c0_i32_0 : i32, i32, i32
  }
}

</mosaic_0001>

<llo_original>
// kernel: tpu_custom_call.1
$region0: #{tpu_custom_call.1}
  #allocation0 [shape = 'u32[]', space=smem, size = 0x4, offset = 0x4, fixed_abs, tag = 'smem constant byte address 0x4 - core index']
  #allocation1 [shape = 'u32[144,128]{1,0:T(1,128)}', space=vmem, size = 0x12000, scoped, tag = 'internal scratch']
  #allocation2 [shape = 'f32[8,1]{1,0:T(8,128)}', space=vmem, size = 0x1000, scoped, tag = 'scratch operand']
  #allocation3 [shape = 's32[1]{0}', space=sflag, size = 0x4, scoped, tag = 'scoped memory for tpu_custom_call.1']
  #allocation4 [shape = 'u8[512]{0}', space=smem, size = 0x200, scoped, tag = 'prefetched SMEM operand 0']
  %s0 = inlined_call_operand.hbm [shape: s32[2], index: 0, kind: input, shape index: {}]
  %s1 = inlined_call_operand.hbm [shape: f32[2,16,33], index: 1, kind: input, shape index: {}]
  %s2 = inlined_call_operand.hbm [shape: f32[2,8,33], index: 2, kind: input, shape index: {}]
  %s3 = inlined_call_operand.vmem [shape: f32[2,8,1], index: 3, kind: input, shape index: {}]
  %s4 = inlined_call_operand.vmem [shape: bf16[33,33], index: 4, kind: input, shape index: {}]
  %s5 = inlined_call_operand.hbm [shape: f32[1,33], index: 5, kind: input, shape index: {}]
  %s6 = inlined_call_operand.vmem [shape: bf16[33,33], index: 6, kind: input, shape index: {}]
  %s7 = inlined_call_operand.vmem [shape: f32[1,33], index: 7, kind: input, shape index: {}]
  %s8 = inlined_call_operand.hbm [shape: f32[2,8,33], index: 8, kind: output, shape index: {0}]
  %s9 = inlined_call_operand.hbm [shape: f32[2,8,33], index: 9, kind: output, shape index: {1}]
  %s10 = inlined_call_operand.vmem [shape: f32[2,1,1], index: 10, kind: output, shape index: {2}]
  %11 = xla_tuple %s8, %s9, %s10
  %s12 = sld [smem:[#allocation0]]
  $region89: #{tpu_custom_call.1} parent=0
    _
  %s14 = ssub.s32 1, %s12
  %s15 = scalar_select 0, %s14, %s12
  %17 = dma.hbm_to_smem %s0, 16, [#allocation4], [#allocation3]
  %18 = dma.done [#allocation3], 16
  %19 = sfence
  $region1: #{tpu_custom_call.1} parent=0
    #allocation5 [shape = 'u8[16384]{0}', space=vmem, size = 0x4000, scoped, tag = 'input window, operand 1']
    #allocation6 [shape = 's32[2]{0}', space=sflag, size = 0x8, scoped, tag = 'scoped memory for tpu_custom_call.1']
    #allocation7 [shape = 's32[2]{0}', space=sflag, size = 0x8, scoped, tag = 'scoped memory for tpu_custom_call.1']
    #allocation8 [shape = 'u8[8192]{0}', space=vmem, size = 0x2000, scoped, tag = 'input window, operand 2']
    #allocation9 [shape = 's32[2]{0}', space=sflag, size = 0x8, scoped, tag = 'scoped memory for tpu_custom_call.1']
    #allocation10 [shape = 'u8[512]{0}', space=vmem, size = 0x400, scoped, tag = 'input window, operand 5, single buffered']
    #allocation11 [shape = 'u8[8192]{0}', space=vmem, size = 0x2000, scoped, tag = 'output window, operand 0']
    #allocation12 [shape = 'u8[8192]{0}', space=vmem, size = 0x2000, scoped, tag = 'output window, operand 1']
    #allocation13 [shape = 's32[2]{0}', space=sflag, size = 0x8, scoped, tag = 'scoped memory for tpu_custom_call.1']
    %20 = vsyncpa [#allocation6], 0
    %s21 = scalar_lea.sflag [#allocation6], 1
    %22 = vsyncpa %s21, 0
    %23 = vsyncpa [#allocation9], 0
    %s24 = scalar_lea.sflag [#allocation9], 1
    %25 = vsyncpa %s24, 0
    %26 = vsyncpa [#allocation7], 0
    %s27 = scalar_lea.sflag [#allocation7], 1
    %28 = vsyncpa %s27, 0
    %29 = vsyncpa [#allocation13], 0
    %s30 = scalar_lea.sflag [#allocation13], 1
    %31 = vsyncpa %s30, 0
    loop: start=0, step=1, limit=4
    $region2: #{tpu_custom_call.1} parent=1 // loop_pre_header
      _
    $region3: #{tpu_custom_call.1} parent=1 // loop_header
      %s33 = sphi 0, %s37
      %p34 = scmp.ge.s32.totalorder %s33, 4
      %s43 = sphi 0, %s45
      %s46 = sphi 0, %s43
      %s47 = sphi 0, %s46
      %s63 = sphi 0, %s47
      %s69 = sphi 0, %s71
      %s72 = sphi 0, %s69
      %s73 = sphi 0, %s72
      %s89 = sphi 0, %s73
      %s95 = sphi 0, %s97
      %s98 = sphi 0, %s95
      %s99 = sphi 0, %s98
      %s115 = sphi 0, %s99
      %s119 = sphi 0, %s119
      %s121 = sphi 0, %s119
      %s122 = sphi 0, %s121
      %s136 = sphi 0, %s122
      %s140 = sphi 0, %s140
      %s142 = sphi 0, %s140
      %s143 = sphi 0, %s142
      %s157 = sphi 0, %s143
      %s161 = sphi 0, %s161
      %s163 = sphi 0, %s161
      %s164 = sphi 0, %s163
      %s178 = sphi 0, %s164
      %s182 = sphi 0, %s182
      %s184 = sphi 0, %s182
      %s185 = sphi 0, %s184
      %s199 = sphi 0, %s185
      %s205 = sphi 0, %s207
      %s208 = sphi 0, %s205
      %s209 = sphi 0, %s208
      %s225 = sphi 0, %s209
      %s231 = sphi 0, %s233
      %s234 = sphi 0, %s231
      %s235 = sphi 0, %s234
      %s251 = sphi 0, %s235
      %s257 = sphi 0, %s259
      %s260 = sphi 0, %s257
      %s261 = sphi 0, %s260
      %s277 = sphi 0, %s261
    $region4: #{tpu_custom_call.1} parent=1 // loop_header_branch
      %36 = sbr.rel (%p34) target = $region8
    $region5: #{tpu_custom_call.1} parent=1 // loop_body
      %s38 = ssub.s32 %s33, 1
      %s39 = ssub.s32 %s33, 2
      %s40 = sadd.s32 %s33, 1
      %s41 = ssub.s32 %s33, %s40
      %p42 = scmp.eq.s32.totalorder %s41, 0
      %s44 = sadd.s32 %s43, 1
      %s45 = scalar_select %p42, %s43, %s44
      %p48 = pneg %p42
      %p49 = scmp.eq.s32.totalorder %s33, 1
      %p50 = por %p48, %p49
      %p51 = scmp.ne.s32.totalorder %s43, %s46
      %p52 = scmp.eq.s32.totalorder %s33, 0
      %p53 = por %p51, %p52
      %p54 = scmp.ne.s32.totalorder %s43, %s46
      %p55 = scmp.eq.s32.totalorder %s38, 1
      %p56 = por %p54, %p55
      %p57 = scmp.ne.s32.totalorder %s46, %s47
      %p58 = scmp.eq.s32.totalorder %s38, 0
      %p59 = por %p57, %p58
      %p60 = scmp.ne.s32.totalorder %s46, %s47
      %p61 = scmp.eq.s32.totalorder %s39, 1
      %p62 = por %p60, %p61
      %p64 = scmp.ne.s32.totalorder %s47, %s63
      %p65 = scmp.eq.s32.totalorder %s39, 0
      %p66 = por %p64, %p65
      %s67 = ssub.s32 %s33, %s40
      %p68 = scmp.eq.s32.totalorder %s67, 0
      %s70 = sadd.s32 %s69, 1
      %s71 = scalar_select %p68, %s69, %s70
      %p74 = pneg %p68
      %p75 = scmp.eq.s32.totalorder %s33, 1
      %p76 = por %p74, %p75
      %p77 = scmp.ne.s32.totalorder %s69, %s72
      %p78 = scmp.eq.s32.totalorder %s33, 0
      %p79 = por %p77, %p78
      %p80 = scmp.ne.s32.totalorder %s69, %s72
      %p81 = scmp.eq.s32.totalorder %s38, 1
      %p82 = por %p80, %p81
      %p83 = scmp.ne.s32.totalorder %s72, %s73
      %p84 = scmp.eq.s32.totalorder %s38, 0
      %p85 = por %p83, %p84
      %p86 = scmp.ne.s32.totalorder %s72, %s73
      %p87 = scmp.eq.s32.totalorder %s39, 1
      %p88 = por %p86, %p87
      %p90 = scmp.ne.s32.totalorder %s73, %s89
      %p91 = scmp.eq.s32.totalorder %s39, 0
      %p92 = por %p90, %p91
      %s93 = ssub.s32 %s33, %s40
      %p94 = scmp.eq.s32.totalorder %s93, 0
      %s96 = sadd.s32 %s95, 1
      %s97 = scalar_select %p94, %s95, %s96
      %p100 = pneg %p94
      %p101 = scmp.eq.s32.totalorder %s33, 1
      %p102 = por %p100, %p101
      %p103 = scmp.ne.s32.totalorder %s95, %s98
      %p104 = scmp.eq.s32.totalorder %s33, 0
      %p105 = por %p103, %p104
      %p106 = scmp.ne.s32.totalorder %s95, %s98
      %p107 = scmp.eq.s32.totalorder %s38, 1
      %p108 = por %p106, %p107
      %p109 = scmp.ne.s32.totalorder %s98, %s99
      %p110 = scmp.eq.s32.totalorder %s38, 0
      %p111 = por %p109, %p110
      %p112 = scmp.ne.s32.totalorder %s98, %s99
      %p113 = scmp.eq.s32.totalorder %s39, 1
      %p114 = por %p112, %p113
      %p116 = scmp.ne.s32.totalorder %s99, %s115
      %p117 = scmp.eq.s32.totalorder %s39, 0
      %p118 = por %p116, %p117
      %s120 = sadd.s32 %s119, 1
      %p123 = scmp.eq.s32.totalorder %s33, 1
      %p124 = scmp.ne.s32.totalorder %s119, %s121
      %p125 = scmp.eq.s32.totalorder %s33, 0
      %p126 = por %p124, %p125
      %p127 = scmp.ne.s32.totalorder %s119, %s121
      %p128 = scmp.eq.s32.totalorder %s38, 1
      %p129 = por %p127, %p128
      %p130 = scmp.ne.s32.totalorder %s121, %s122
      %p131 = scmp.eq.s32.totalorder %s38, 0
      %p132 = por %p130, %p131
      %p133 = scmp.ne.s32.totalorder %s121, %s122
      %p134 = scmp.eq.s32.totalorder %s39, 1
      %p135 = por %p133, %p134
      %p137 = scmp.ne.s32.totalorder %s122, %s136
      %p138 = scmp.eq.s32.totalorder %s39, 0
      %p139 = por %p137, %p138
      %s141 = sadd.s32 %s140, 1
      %p144 = scmp.eq.s32.totalorder %s33, 1
      %p145 = scmp.ne.s32.totalorder %s140, %s142
      %p146 = scmp.eq.s32.totalorder %s33, 0
      %p147 = por %p145, %p146
      %p148 = scmp.ne.s32.totalorder %s140, %s142
      %p149 = scmp.eq.s32.totalorder %s38, 1
      %p150 = por %p148, %p149
      %p151 = scmp.ne.s32.totalorder %s142, %s143
      %p152 = scmp.eq.s32.totalorder %s38, 0
      %p153 = por %p151, %p152
      %p154 = scmp.ne.s32.totalorder %s142, %s143
      %p155 = scmp.eq.s32.totalorder %s39, 1
      %p156 = por %p154, %p155
      %p158 = scmp.ne.s32.totalorder %s143, %s157
      %p159 = scmp.eq.s32.totalorder %s39, 0
      %p160 = por %p158, %p159
      %s162 = sadd.s32 %s161, 1
      %p165 = scmp.eq.s32.totalorder %s33, 1
      %p166 = scmp.ne.s32.totalorder %s161, %s163
      %p167 = scmp.eq.s32.totalorder %s33, 0
      %p168 = por %p166, %p167
      %p169 = scmp.ne.s32.totalorder %s161, %s163
      %p170 = scmp.eq.s32.totalorder %s38, 1
      %p171 = por %p169, %p170
      %p172 = scmp.ne.s32.totalorder %s163, %s164
      %p173 = scmp.eq.s32.totalorder %s38, 0
      %p174 = por %p172, %p173
      %p175 = scmp.ne.s32.totalorder %s163, %s164
      %p176 = scmp.eq.s32.totalorder %s39, 1
      %p177 = por %p175, %p176
      %p179 = scmp.ne.s32.totalorder %s164, %s178
      %p180 = scmp.eq.s32.totalorder %s39, 0
      %p181 = por %p179, %p180
      %s183 = sadd.s32 %s182, 1
      %p186 = scmp.eq.s32.totalorder %s33, 1
      %p187 = scmp.ne.s32.totalorder %s182, %s184
      %p188 = scmp.eq.s32.totalorder %s33, 0
      %p189 = por %p187, %p188
      %p190 = scmp.ne.s32.totalorder %s182, %s184
      %p191 = scmp.eq.s32.totalorder %s38, 1
      %p192 = por %p190, %p191
      %p193 = scmp.ne.s32.totalorder %s184, %s185
      %p194 = scmp.eq.s32.totalorder %s38, 0
      %p195 = por %p193, %p194
      %p196 = scmp.ne.s32.totalorder %s184, %s185
      %p197 = scmp.eq.s32.totalorder %s39, 1
      %p198 = por %p196, %p197
      %p200 = scmp.ne.s32.totalorder %s185, %s199
      %p201 = scmp.eq.s32.totalorder %s39, 0
      %p202 = por %p200, %p201
      %s203 = ssub.s32 %s33, %s40
      %p204 = scmp.eq.s32.totalorder %s203, 0
      %s206 = sadd.s32 %s205, 1
      %s207 = scalar_select %p204, %s205, %s206
      %p210 = pneg %p204
      %p211 = scmp.eq.s32.totalorder %s33, 1
      %p212 = por %p210, %p211
      %p213 = scmp.ne.s32.totalorder %s205, %s208
      %p214 = scmp.eq.s32.totalorder %s33, 0
      %p215 = por %p213, %p214
      %p216 = scmp.ne.s32.totalorder %s205, %s208
      %p217 = scmp.eq.s32.totalorder %s38, 1
      %p218 = por %p216, %p217
      %p219 = scmp.ne.s32.totalorder %s208, %s209
      %p220 = scmp.eq.s32.totalorder %s38, 0
      %p221 = por %p219, %p220
      %p222 = scmp.ne.s32.totalorder %s208, %s209
      %p223 = scmp.eq.s32.totalorder %s39, 1
      %p224 = por %p222, %p223
      %p226 = scmp.ne.s32.totalorder %s209, %s225
      %p227 = scmp.eq.s32.totalorder %s39, 0
      %p228 = por %p226, %p227
      %s229 = ssub.s32 %s33, %s40
      %p230 = scmp.eq.s32.totalorder %s229, 0
      %s232 = sadd.s32 %s231, 1
      %s233 = scalar_select %p230, %s231, %s232
      %p236 = pneg %p230
      %p237 = scmp.eq.s32.totalorder %s33, 1
      %p238 = por %p236, %p237
      %p239 = scmp.ne.s32.totalorder %s231, %s234
      %p240 = scmp.eq.s32.totalorder %s33, 0
      %p241 = por %p239, %p240
      %p242 = scmp.ne.s32.totalorder %s231, %s234
      %p243 = scmp.eq.s32.totalorder %s38, 1
      %p244 = por %p242, %p243
      %p245 = scmp.ne.s32.totalorder %s234, %s235
      %p246 = scmp.eq.s32.totalorder %s38, 0
      %p247 = por %p245, %p246
      %p248 = scmp.ne.s32.totalorder %s234, %s235
      %p249 = scmp.eq.s32.totalorder %s39, 1
      %p250 = por %p248, %p249
      %p252 = scmp.ne.s32.totalorder %s235, %s251
      %p253 = scmp.eq.s32.totalorder %s39, 0
      %p254 = por %p252, %p253
      %s255 = ssub.s32 %s33, %s40
      %p256 = scmp.eq.s32.totalorder %s255, 0
      %s258 = sadd.s32 %s257, 1
      %s259 = scalar_select %p256, %s257, %s258
      %p262 = pneg %p256
      %p263 = scmp.eq.s32.totalorder %s33, 1
      %p264 = por %p262, %p263
      %p265 = scmp.ne.s32.totalorder %s257, %s260
      %p266 = scmp.eq.s32.totalorder %s33, 0
      %p267 = por %p265, %p266
      %p268 = scmp.ne.s32.totalorder %s257, %s260
      %p269 = scmp.eq.s32.totalorder %s38, 1
      %p270 = por %p268, %p269
      %p271 = scmp.ne.s32.totalorder %s260, %s261
      %p272 = scmp.eq.s32.totalorder %s38, 0
      %p273 = por %p271, %p272
      %p274 = scmp.ne.s32.totalorder %s260, %s261
      %p275 = scmp.eq.s32.totalorder %s39, 1
      %p276 = por %p274, %p275
      %p278 = scmp.ne.s32.totalorder %s261, %s277
      %p279 = scmp.eq.s32.totalorder %s39, 0
      %p280 = por %p278, %p279
      %p281 = scmp.le.s32.totalorder 1, %s33
      %p282 = scmp.lt.s32.totalorder %s33, 3
      %p283 = pnand %p281, %p282
      %p284 = pneg %p283
      // Predicated region
      $region9: #{tpu_custom_call.1} parent=5 // pred_check
        _
      $region10: #{tpu_custom_call.1} parent=5 // pred_check_branch
        %286 = sbr.rel (%p283) target = $region12
      $region11: #{tpu_custom_call.1} parent=5 // pred_region
        %s287 = ssub.s32 %s33, 1
        // Predicated region
        $region13: #{tpu_custom_call.1} parent=11 // pred_check
          %p288 = pneg %p132
        $region14: #{tpu_custom_call.1} parent=11 // pred_check_branch
          %290 = sbr.rel (%p288) target = $region16
        $region15: #{tpu_custom_call.1} parent=11 // pred_region
          _
        $region16: #{tpu_custom_call.1} parent=11 // pred_fallthru
          _
        // Predicated region
        $region17: #{tpu_custom_call.1} parent=11 // pred_check
          %p291 = pneg %p153
        $region18: #{tpu_custom_call.1} parent=11 // pred_check_branch
          %293 = sbr.rel (%p291) target = $region20
        $region19: #{tpu_custom_call.1} parent=11 // pred_region
          %s295 = ssub.s32 16, 16
          %296 = vsyncadd [#allocation9], %s295
          %s298 = sshll.u32 [#allocation10], 4
          %s299 = int_to_ptr.vmem [resolvable:$true] %s298
          %301 = dma.hbm_to_vmem [thread:$0]  %s5, 16, %s299, [#allocation9]
        $region20: #{tpu_custom_call.1} parent=11 // pred_fallthru
          _
        // Predicated region
        $region21: #{tpu_custom_call.1} parent=11 // pred_check
          %p302 = pneg %p174
        $region22: #{tpu_custom_call.1} parent=11 // pred_check_branch
          %304 = sbr.rel (%p302) target = $region24
        $region23: #{tpu_custom_call.1} parent=11 // pred_region
          _
        $region24: #{tpu_custom_call.1} parent=11 // pred_fallthru
          _
        // Predicated region
        $region25: #{tpu_custom_call.1} parent=11 // pred_check
          %p305 = pneg %p195
        $region26: #{tpu_custom_call.1} parent=11 // pred_check_branch
          %307 = sbr.rel (%p305) target = $region28
        $region27: #{tpu_custom_call.1} parent=11 // pred_region
          _
        $region28: #{tpu_custom_call.1} parent=11 // pred_fallthru
          _
      $region12: #{tpu_custom_call.1} parent=5 // pred_fallthru
        _
      %p308 = scmp.lt.s32.totalorder %s33, 2
      // Predicated region
      $region29: #{tpu_custom_call.1} parent=5 // pred_check
        %p309 = pneg %p308
      $region30: #{tpu_custom_call.1} parent=5 // pred_check_branch
        %311 = sbr.rel (%p309) target = $region32
      $region31: #{tpu_custom_call.1} parent=5 // pred_region
        // Predicated region
        $region33: #{tpu_custom_call.1} parent=31 // pred_check
          %p312 = pneg %p53
        $region34: #{tpu_custom_call.1} parent=31 // pred_check_branch
          %314 = sbr.rel (%p312) target = $region36
        $region35: #{tpu_custom_call.1} parent=31 // pred_region
          %s315 = sand.u32 %s43, 1
          %s316 = scalar_lea.sflag [#allocation6], %s315
          %s317 = sand.u32 %s43, 1
          %s318 = smul.addr %s317, 16
          %s319 = scalar_lea.vmem [#allocation5], %s318
          %s321 = ssub.s32 256, 256
          %322 = vsyncadd %s316, %s321
          %s323 = smul.addr %s33, 2
          %s324 = smul.addr %s323, 128
          %s325 = scalar_lea.hbm %s1, %s324
          %s326 = sshll.u32 %s319, 4
          %s327 = int_to_ptr.vmem [resolvable:$true] %s326
          %332 = dma.hbm_to_vmem [thread:$0]  %s325, 256, %s327, %s316, 128, 128, 8
        $region36: #{tpu_custom_call.1} parent=31 // pred_fallthru
          _
        // Predicated region
        $region37: #{tpu_custom_call.1} parent=31 // pred_check
          %p333 = pneg %p79
        $region38: #{tpu_custom_call.1} parent=31 // pred_check_branch
          %335 = sbr.rel (%p333) target = $region40
        $region39: #{tpu_custom_call.1} parent=31 // pred_region
          %s336 = sand.u32 %s33, 1
          %s337 = scalar_lea.sflag [#allocation9], %s336
          %s338 = sand.u32 %s69, 1
          %s339 = smul.addr %s338, 8
          %s340 = scalar_lea.vmem [#allocation8], %s339
          %s342 = ssub.s32 128, 128
          %343 = vsyncadd %s337, %s342
          %s344 = smul.addr %s33, 128
          %s345 = scalar_lea.hbm %s2, %s344
          %s347 = sshll.u32 %s340, 4
          %s348 = int_to_ptr.vmem [resolvable:$true] %s347
          %350 = dma.hbm_to_vmem [thread:$0]  %s345, 128, %s348, %s337
        $region40: #{tpu_custom_call.1} parent=31 // pred_fallthru
          _
        // Predicated region
        $region41: #{tpu_custom_call.1} parent=31 // pred_check
          %p351 = pneg %p105
        $region42: #{tpu_custom_call.1} parent=31 // pred_check_branch
          %353 = sbr.rel (%p351) target = $region44
        $region43: #{tpu_custom_call.1} parent=31 // pred_region
          %p354 = scmp.lt.s32.totalorder %s33, 1
          %s355 = scalar_select %p354, %s33, 1
          %s356 = smul.addr %s355, 8
          %s357 = scalar_lea.vmem %s3, %s356
        $region44: #{tpu_custom_call.1} parent=31 // pred_fallthru
          _
      $region32: #{tpu_custom_call.1} parent=5 // pred_fallthru
        _
      %p358 = scmp.le.s32.totalorder 1, %s33
      %p359 = scmp.lt.s32.totalorder %s33, 3
      %p360 = pnand %p358, %p359
      %p361 = pneg %p360
      // Predicated region
      $region45: #{tpu_custom_call.1} parent=5 // pred_check
        _
      $region46: #{tpu_custom_call.1} parent=5 // pred_check_branch
        %363 = sbr.rel (%p360) target = $region48
      $region47: #{tpu_custom_call.1} parent=5 // pred_region
        %s364 = ssub.s32 %s33, 1
        %s365 = sand.u32 %s46, 1
        %s366 = scalar_lea.sflag [#allocation6], %s365
        %s367 = sand.u32 %s46, 1
        %s368 = smul.addr %s367, 16
        %s369 = scalar_lea.vmem [#allocation5], %s368
        // Predicated region
        $region49: #{tpu_custom_call.1} parent=47 // pred_check
          %p370 = pneg %p59
        $region50: #{tpu_custom_call.1} parent=47 // pred_check_branch
          %372 = sbr.rel (%p370) target = $region52
        $region51: #{tpu_custom_call.1} parent=47 // pred_region
          %373 = dma.done %s366, 256
        $region52: #{tpu_custom_call.1} parent=47 // pred_fallthru
          _
        %s374 = sand.u32 %s38, 1
        %s375 = scalar_lea.sflag [#allocation9], %s374
        %s376 = sand.u32 %s72, 1
        %s377 = smul.addr %s376, 8
        %s378 = scalar_lea.vmem [#allocation8], %s377
        // Predicated region
        $region53: #{tpu_custom_call.1} parent=47 // pred_check
          %p379 = pneg %p85
        $region54: #{tpu_custom_call.1} parent=47 // pred_check_branch
          %381 = sbr.rel (%p379) target = $region56
        $region55: #{tpu_custom_call.1} parent=47 // pred_region
          %382 = dma.done %s375, 128
        $region56: #{tpu_custom_call.1} parent=47 // pred_fallthru
          _
        // Predicated region
        $region57: #{tpu_custom_call.1} parent=47 // pred_check
          %p383 = pneg %p153
        $region58: #{tpu_custom_call.1} parent=47 // pred_check_branch
          %385 = sbr.rel (%p383) target = $region60
        $region59: #{tpu_custom_call.1} parent=47 // pred_region
          %386 = dma.done [#allocation9], 16
        $region60: #{tpu_custom_call.1} parent=47 // pred_fallthru
          _
        %s387 = sand.u32 %s46, 1
        %s388 = scalar_lea.sflag [#allocation6], %s387
        %s389 = sand.u32 %s46, 1
        %s390 = smul.addr %s389, 16
        %s391 = scalar_lea.vmem [#allocation5], %s390
        %p392 = pneg %p59
        %p393 = pneg %p56
        %s394 = sand.u32 %s38, 1
        %s395 = scalar_lea.sflag [#allocation9], %s394
        %s396 = sand.u32 %s72, 1
        %s397 = smul.addr %s396, 8
        %s398 = scalar_lea.vmem [#allocation8], %s397
        %p399 = pneg %p85
        %p400 = pneg %p82
        %p401 = scmp.lt.s32.totalorder %s38, 1
        %s402 = scalar_select %p401, %s38, 1
        %s403 = smul.addr %s402, 8
        %s404 = scalar_lea.vmem %s3, %s403
        %p405 = pneg %p111
        %p406 = pneg %p108
        %p407 = pneg %p132
        %p408 = pneg %p129
        %p409 = pneg %p153
        %p410 = pneg %p150
        %p411 = pneg %p174
        %p412 = pneg %p171
        %p413 = pneg %p195
        %p414 = pneg %p192
        %p415 = pneg %p221
        %p416 = pneg %p218
        %s417 = sand.u32 %s208, 1
        %s418 = scalar_lea.sflag [#allocation7], %s417
        %s419 = sand.u32 %s208, 1
        %s420 = smul.addr %s419, 8
        %s421 = scalar_lea.vmem [#allocation11], %s420
        %p422 = pneg %p247
        %p423 = pneg %p244
        %s424 = sand.u32 %s234, 1
        %s425 = scalar_lea.sflag [#allocation13], %s424
        %s426 = sand.u32 %s234, 1
        %s427 = smul.addr %s426, 8
        %s428 = scalar_lea.vmem [#allocation12], %s427
        %p429 = pneg %p273
        %p430 = pneg %p270
        %p431 = scmp.lt.s32.totalorder %s38, 1
        %s432 = scalar_select %p431, %s38, 1
        %s433 = scalar_lea.vmem %s10, %s432
        %p434 = scmp.lt.s32.totalorder %s38, 1
        %s435 = scalar_select %p434, %s38, 1
        %s436 = smul.addr %s435, 8
        %s437 = scalar_lea.vmem %s3, %s436
        %p438 = scmp.lt.s32.totalorder %s38, 1
        %s439 = scalar_select %p438, %s38, 1
        %s440 = scalar_lea.vmem %s10, %s439
        %v442 = vld [vmem:[%s369] sm:$0xff]
        %v443 = vld [vmem:[%s369 + $0x8] sm:$0xff]
        %v444 = vxor.u32 %v442, 2147483648
        %v445 = vxor.u32 %v443, 2147483648
        %v446 = vmul.f32 %v444, 1.442695
        %v447 = vpow.pop %v446
        %v448 = vmul.f32 %v445, 1.442695
        %v449 = vpow.pop %v448
        %v450 = vadd.f32 %v447, 1.0
        %v451 = vadd.f32 %v449, 1.0
        %v452 = vrcp.pop %v450
        %v453 = vmul.f32 1.0, %v452
        %v454 = vrcp.pop %v451
        %v455 = vmul.f32 1.0, %v454
        %458 = vrot.lane.b32.xlu0 %v453, 96
        %v459 = vpop.permute.xlu0 %458
        %460 = vrot.lane.b32.xlu0 %v455, 96
        %v461 = vpop.permute.xlu0 %460
        %vm464 = vcmask 7168
        %v465 = vsel %vm464, %v459, 0.0
        %v466 = vsel %vm464, %v461, 0.0
        %v467 = vadd.f32 %v465, %v466
        %468 = vadd.xlane.f32.xlu0 %v467
        %v469 = vpop.xlane.xlu0 %468
        %v470 = vrot.slane %v469, 4
        %v471 = vadd.f32 %v469, %v470
        %v472 = vrot.slane %v471, 2
        %v473 = vadd.f32 %v471, %v472
        %v474 = vrot.slane %v473, 1
        %v475 = vadd.f32 %v473, %v474
        %s476 = vtos %v475
        %s477 = sld [smem:[#allocation4 + %s38]]
        %s478 = scvt.s32.f32 %s477
        %s479 = ssub.f32 %s478, %s476
        %s480 = smul.f32 %s479, %s479
        %v481 = vstv %s480
        %vm482 = vcmask 0
        %483 = vst.msk [vmem:[%s440] sm:$0x1] %vm482, %v481
        %s484 = smax.f32 %s476, 1e-06
        %v485 = vstv %s484
        %v486 = vrcp.pop %v485
        %s487 = vtos %v486
        %s488 = smul.f32 %s478, %s487
        %v489 = vstv %s488
        %v490 = vmul.f32 %v453, %v489
        %492 = vrot.lane.b32.xlu0 %v490, 96
        %v493 = vpop.permute.xlu0 %492
        %495 = vst.msk [vmem:[#allocation2] sm:$0xff] %vm464, %v493
        %v496 = vlaneseq
        %v497 = vshrl.u32 %v496, 7
        %v498 = vlaneseq
        %v499 = vand.u32 %v498, 127
        %v500 = vld [vmem:[#allocation2] sm:$0x1]
        %v501 = vadd.f32 %v500, 0.0
        %vm502 = vcmp.ge.f32.partialorder %v501, 1.0
        %v503 = vsel %vm502, 1, 0
        %v504 = vcvt.s32.f32 %v503
        %v505 = vsub.f32 %v501, %v504
        %v506 = vsel %vm502, 1.0, %v500
        %v507 = vsel %vm502, %v505, %v500
        %v508 = vadd.f32 %v504, 0.0
        %vm509 = vcmp.eq.s32.totalorder %v497, 0
        %v510 = vlaneseq
        %v511 = vshrl.u32 %v510, 7
        %v512 = vsub.s32 0, %v511
        %v513 = vrot.slane %v506, %v512
        %v514 = vsel %vm509, %v513, 0.0
        %vm515 = vcmp.eq.s32.totalorder %v499, 0
        %517 = vset.pattern.permute.xlu0 0
        %518 = vperm.xlu0 %517, %v507
        %v519 = vpop.permute.xlu0 %518
        %v521 = vsel %vm515, %v519, 0.0
        %523 = vset.pattern.permute.xlu0 0
        %524 = vperm.xlu0 %523, %v508
        %v525 = vpop.permute.xlu0 %524
        %v527 = vsel %vm515, %v525, 0.0
        %v528 = vld [vmem:[#allocation2 + $0x1] sm:$0x1]
        %v529 = vadd.f32 %v528, %v505
        %vm530 = vcmp.ge.f32.partialorder %v529, 1.0
        %v531 = vsel %vm530, 1, 0
        %v532 = vcvt.s32.f32 %v531
        %v533 = vsub.f32 %v529, %v532
        %v534 = vsub.f32 1.0, %v505
        %v535 = vsel %vm530, %v534, %v528
        %v536 = vsel %vm530, %v533, %v528
        %v537 = vadd.f32 %v508, %v532
        %vm538 = vcmp.eq.s32.totalorder %v497, 1
        %v539 = vlaneseq
        %v540 = vshrl.u32 %v539, 7
        %v541 = vsub.s32 0, %v540
        %v542 = vrot.slane %v535, %v541
        %v543 = vsel %vm538, %v542, %v514
        %v544 = vlaneseq
        %v545 = vshrl.u32 %v544, 7
        %v546 = vsub.s32 0, %v545
        %v547 = vrot.slane %v508, %v546
        %v548 = vsel %vm538, %v547, 0.0
        %vm549 = vcmp.eq.s32.totalorder %v499, 1
        %551 = vset.pattern.permute.xlu0 0
        %552 = vperm.xlu0 %551, %v536
        %v553 = vpop.permute.xlu0 %552
        %v555 = vsel %vm549, %v553, %v521
        %557 = vset.pattern.permute.xlu0 0
        %558 = vperm.xlu0 %557, %v537
        %v559 = vpop.permute.xlu0 %558
        %v561 = vsel %vm549, %v559, %v527
        %v562 = vld [vmem:[#allocation2 + $0x2] sm:$0x1]
        %v563 = vadd.f32 %v562, %v533
        %vm564 = vcmp.ge.f32.partialorder %v563, 1.0
        %v565 = vsel %vm564, 1, 0
        %v566 = vcvt.s32.f32 %v565
        %v567 = vsub.f32 %v563, %v566
        %v568 = vsub.f32 1.0, %v533
        %v569 = vsel %vm564, %v568, %v562
        %v570 = vsel %vm564, %v567, %v562
        %v571 = vadd.f32 %v537, %v566
        %vm572 = vcmp.eq.s32.totalorder %v497, 2
        %v573 = vlaneseq
        %v574 = vshrl.u32 %v573, 7
        %v575 = vsub.s32 0, %v574
        %v576 = vrot.slane %v569, %v575
        %v577 = vsel %vm572, %v576, %v543
        %v578 = vlaneseq
        %v579 = vshrl.u32 %v578, 7
        %v580 = vsub.s32 0, %v579
        %v581 = vrot.slane %v537, %v580
        %v582 = vsel %vm572, %v581, %v548
        %vm583 = vcmp.eq.s32.totalorder %v499, 2
        %585 = vset.pattern.permute.xlu0 0
        %586 = vperm.xlu0 %585, %v570
        %v587 = vpop.permute.xlu0 %586
        %v589 = vsel %vm583, %v587, %v555
        %591 = vset.pattern.permute.xlu0 0
        %592 = vperm.xlu0 %591, %v571
        %v593 = vpop.permute.xlu0 %592
        %v595 = vsel %vm583, %v593, %v561
        %v596 = vld [vmem:[#allocation2 + $0x3] sm:$0x1]
        %v597 = vadd.f32 %v596, %v567
        %vm598 = vcmp.ge.f32.partialorder %v597, 1.0
        %v599 = vsel %vm598, 1, 0
        %v600 = vcvt.s32.f32 %v599
        %v601 = vsub.f32 %v597, %v600
        %v602 = vsub.f32 1.0, %v567
        %v603 = vsel %vm598, %v602, %v596
        %v604 = vsel %vm598, %v601, %v596
        %v605 = vadd.f32 %v571, %v600
        %vm606 = vcmp.eq.s32.totalorder %v497, 3
        %v607 = vlaneseq
        %v608 = vshrl.u32 %v607, 7
        %v609 = vsub.s32 0, %v608
        %v610 = vrot.slane %v603, %v609
        %v611 = vsel %vm606, %v610, %v577
        %v612 = vlaneseq
        %v613 = vshrl.u32 %v612, 7
        %v614 = vsub.s32 0, %v613
        %v615 = vrot.slane %v571, %v614
        %v616 = vsel %vm606, %v615, %v582
        %vm617 = vcmp.eq.s32.totalorder %v499, 3
        %619 = vset.pattern.permute.xlu0 0
        %620 = vperm.xlu0 %619, %v604
        %v621 = vpop.permute.xlu0 %620
        %v623 = vsel %vm617, %v621, %v589
        %625 = vset.pattern.permute.xlu0 0
        %626 = vperm.xlu0 %625, %v605
        %v627 = vpop.permute.xlu0 %626
        %v629 = vsel %vm617, %v627, %v595
        %v630 = vld [vmem:[#allocation2 + $0x4] sm:$0x1]
        %v631 = vadd.f32 %v630, %v601
        %vm632 = vcmp.ge.f32.partialorder %v631, 1.0
        %v633 = vsel %vm632, 1, 0
        %v634 = vcvt.s32.f32 %v633
        %v635 = vsub.f32 %v631, %v634
        %v636 = vsub.f32 1.0, %v601
        %v637 = vsel %vm632, %v636, %v630
        %v638 = vsel %vm632, %v635, %v630
        %v639 = vadd.f32 %v605, %v634
        %vm640 = vcmp.eq.s32.totalorder %v497, 4
        %v641 = vlaneseq
        %v642 = vshrl.u32 %v641, 7
        %v643 = vsub.s32 0, %v642
        %v644 = vrot.slane %v637, %v643
        %v645 = vsel %vm640, %v644, %v611
        %v646 = vlaneseq
        %v647 = vshrl.u32 %v646, 7
        %v648 = vsub.s32 0, %v647
        %v649 = vrot.slane %v605, %v648
        %v650 = vsel %vm640, %v649, %v616
        %vm651 = vcmp.eq.s32.totalorder %v499, 4
        %653 = vset.pattern.permute.xlu0 0
        %654 = vperm.xlu0 %653, %v638
        %v655 = vpop.permute.xlu0 %654
        %v657 = vsel %vm651, %v655, %v623
        %659 = vset.pattern.permute.xlu0 0
        %660 = vperm.xlu0 %659, %v639
        %v661 = vpop.permute.xlu0 %660
        %v663 = vsel %vm651, %v661, %v629
        %v664 = vld [vmem:[#allocation2 + $0x5] sm:$0x1]
        %v665 = vadd.f32 %v664, %v635
        %vm666 = vcmp.ge.f32.partialorder %v665, 1.0
        %v667 = vsel %vm666, 1, 0
        %v668 = vcvt.s32.f32 %v667
        %v669 = vsub.f32 %v665, %v668
        %v670 = vsub.f32 1.0, %v635
        %v671 = vsel %vm666, %v670, %v664
        %v672 = vsel %vm666, %v669, %v664
        %v673 = vadd.f32 %v639, %v668
        %vm674 = vcmp.eq.s32.totalorder %v497, 5
        %v675 = vlaneseq
        %v676 = vshrl.u32 %v675, 7
        %v677 = vsub.s32 0, %v676
        %v678 = vrot.slane %v671, %v677
        %v679 = vsel %vm674, %v678, %v645
        %v680 = vlaneseq
        %v681 = vshrl.u32 %v680, 7
        %v682 = vsub.s32 0, %v681
        %v683 = vrot.slane %v639, %v682
        %v684 = vsel %vm674, %v683, %v650
        %vm685 = vcmp.eq.s32.totalorder %v499, 5
        %687 = vset.pattern.permute.xlu0 0
        %688 = vperm.xlu0 %687, %v672
        %v689 = vpop.permute.xlu0 %688
        %v691 = vsel %vm685, %v689, %v657
        %693 = vset.pattern.permute.xlu0 0
        %694 = vperm.xlu0 %693, %v673
        %v695 = vpop.permute.xlu0 %694
        %v697 = vsel %vm685, %v695, %v663
        %v698 = vld [vmem:[#allocation2 + $0x6] sm:$0x1]
        %v699 = vadd.f32 %v698, %v669
        %vm700 = vcmp.ge.f32.partialorder %v699, 1.0
        %v701 = vsel %vm700, 1, 0
        %v702 = vcvt.s32.f32 %v701
        %v703 = vsub.f32 %v699, %v702
        %v704 = vsub.f32 1.0, %v669
        %v705 = vsel %vm700, %v704, %v698
        %v706 = vsel %vm700, %v703, %v698
        %v707 = vadd.f32 %v673, %v702
        %vm708 = vcmp.eq.s32.totalorder %v497, 6
        %v709 = vlaneseq
        %v710 = vshrl.u32 %v709, 7
        %v711 = vsub.s32 0, %v710
        %v712 = vrot.slane %v705, %v711
        %v713 = vsel %vm708, %v712, %v679
        %v714 = vlaneseq
        %v715 = vshrl.u32 %v714, 7
        %v716 = vsub.s32 0, %v715
        %v717 = vrot.slane %v673, %v716
        %v718 = vsel %vm708, %v717, %v684
        %vm719 = vcmp.eq.s32.totalorder %v499, 6
        %721 = vset.pattern.permute.xlu0 0
        %722 = vperm.xlu0 %721, %v706
        %v723 = vpop.permute.xlu0 %722
        %v725 = vsel %vm719, %v723, %v691
        %727 = vset.pattern.permute.xlu0 0
        %728 = vperm.xlu0 %727, %v707
        %v729 = vpop.permute.xlu0 %728
        %v731 = vsel %vm719, %v729, %v697
        %v732 = vld [vmem:[#allocation2 + $0x7] sm:$0x1]
        %v733 = vadd.f32 %v732, %v703
        %vm734 = vcmp.ge.f32.partialorder %v733, 1.0
        %v735 = vsel %vm734, 1, 0
        %v736 = vcvt.s32.f32 %v735
        %v737 = vsub.f32 %v733, %v736
        %v738 = vsub.f32 1.0, %v703
        %v739 = vsel %vm734, %v738, %v732
        %v740 = vsel %vm734, %v737, %v732
        %v741 = vadd.f32 %v707, %v736
        %vm742 = vcmp.eq.s32.totalorder %v497, 7
        %v743 = vlaneseq
        %v744 = vshrl.u32 %v743, 7
        %v745 = vsub.s32 0, %v744
        %v746 = vrot.slane %v739, %v745
        %v747 = vsel %vm742, %v746, %v713
        %v748 = vlaneseq
        %v749 = vshrl.u32 %v748, 7
        %v750 = vsub.s32 0, %v749
        %v751 = vrot.slane %v707, %v750
        %v752 = vsel %vm742, %v751, %v718
        %vm753 = vcmp.eq.s32.totalorder %v499, 7
        %755 = vset.pattern.permute.xlu0 0
        %756 = vperm.xlu0 %755, %v740
        %v757 = vpop.permute.xlu0 %756
        %v759 = vsel %vm753, %v757, %v725
        %761 = vset.pattern.permute.xlu0 0
        %762 = vperm.xlu0 %761, %v741
        %v763 = vpop.permute.xlu0 %762
        %v765 = vsel %vm753, %v763, %v731
        %vm766 = vcmp.lt.s32.totalorder %v499, %v497
        %768 = vset.pattern.permute.xlu0 0
        %769 = vperm.xlu0 %768, %v752
        %v770 = vpop.permute.xlu0 %769
        %v772 = vlaneseq
        %v773 = vshrl.u32 %v772, 7
        %v774 = vsub.s32 0, %v773
        %v775 = vrot.slane %v765, %v774
        %vm776 = vcmp.eq.f32.partialorder %v770, %v775
        %vm777 = vmand %vm766, %vm776
        %v778 = vlaneseq
        %v779 = vshrl.u32 %v778, 7
        %v780 = vsub.s32 0, %v779
        %v781 = vrot.slane %v759, %v780
        %v782 = vsel %vm777, %v781, 0.0
        %vm783 = vcmp.eq.s32.totalorder %v499, %v497
        %785 = vset.pattern.permute.xlu0 0
        %786 = vperm.xlu0 %785, %v747
        %v787 = vpop.permute.xlu0 %786
        %v789 = vsel %vm783, %v787, 0.0
        %v790 = vadd.f32 %v782, %v789
        %v791 = vld [vmem:[%s369] sm:$0xff]
        %vm792 = vcmask 64512
        %v794 = vsel %vm792, %v790, 0
        %796 = vmatprep.subr.mxu0 0.0
        %797 = vmatpush1.msra.mxu0 %v791
        %798 = vmatprep.subr.mxu0 0.0
        %799 = vmatpush1.msra.mxu0 0.0
        %800 = vmatprep.subr.mxu0 0.0
        %801 = vmatpush1.msra.mxu0 0.0
        %802 = vmatprep.subr.mxu0 0.0
        %803 = vmatpush1.msra.mxu0 0.0
        %804 = vmatprep.subr.mxu0 0.0
        %805 = vmatpush1.msra.mxu0 0.0
        %806 = vmatprep.subr.mxu0 0.0
        %807 = vmatpush1.msra.mxu0 0.0
        %808 = vmatprep.subr.mxu0 0.0
        %809 = vmatpush1.msra.mxu0 0.0
        %810 = vmatprep.subr.mxu0 0.0
        %811 = vmatpush1.msra.mxu0 0.0
        %812 = vmatprep.subr.mxu0 0.0
        %813 = vmatpush1.msra.mxu0 0.0
        %814 = vmatprep.subr.mxu0 0.0
        %815 = vmatpush1.msra.mxu0 0.0
        %816 = vmatprep.subr.mxu0 0.0
        %817 = vmatpush1.msra.mxu0 0.0
        %818 = vmatprep.subr.mxu0 0.0
        %819 = vmatpush1.msra.mxu0 0.0
        %820 = vmatprep.subr.mxu0 0.0
        %821 = vmatpush1.msra.mxu0 0.0
        %822 = vmatprep.subr.mxu0 0.0
        %823 = vmatpush1.msra.mxu0 0.0
        %824 = vmatprep.subr.mxu0 0.0
        %825 = vmatpush1.msra.mxu0 0.0
        %826 = vmatprep.subr.mxu0 0.0
        %827 = vmatpush1.msra.mxu0 0.0
        %828 = vmatprep.subr.mxu0 0.0
        %829 = vmatpush1.msra.mxu0 0.0
        %830 = vmatprep.subr.mxu0 0.0
        %831 = vmatpush1.msra.mxu0 0.0
        %832 = vmatprep.subr.mxu0 0.0
        %833 = vmatpush1.msra.mxu0 0.0
        %834 = vmatprep.subr.mxu0 0.0
        %835 = vmatpush1.msra.mxu0 0.0
        %836 = vmatprep.subr.mxu0 0.0
        %837 = vmatpush1.msra.mxu0 0.0
        %838 = vmatprep.subr.mxu0 0.0
        %839 = vmatpush1.msra.mxu0 0.0
        %840 = vmatprep.subr.mxu0 0.0
        %841 = vmatpush1.msra.mxu0 0.0
        %842 = vmatprep.subr.mxu0 0.0
        %843 = vmatpush1.msra.mxu0 0.0
        %844 = vmatprep.subr.mxu0 0.0
        %845 = vmatpush1.msra.mxu0 0.0
        %846 = vmatprep.subr.mxu0 0.0
        %847 = vmatpush1.msra.mxu0 0.0
        %848 = vmatprep.subr.mxu0 0.0
        %849 = vmatpush1.msra.mxu0 0.0
        %850 = vmatprep.subr.mxu0 0.0
        %851 = vmatpush1.msra.mxu0 0.0
        %852 = vmatprep.subr.mxu0 0.0
        %853 = vmatpush1.msra.mxu0 0.0
        %854 = vmatprep.subr.mxu0 0.0
        %855 = vmatpush1.msra.mxu0 0.0
        %856 = vmatprep.subr.mxu0 0.0
        %857 = vmatpush1.msra.mxu0 0.0
        %858 = vmatprep.subr.mxu0 0.0
        %859 = vmatpush1.msra.mxu0 0.0
        %860 = vmatprep.mubr.f32.mxu0 0.0
        %861 = vmatmul.mubr.f32.gmra.mrb[0].mxu0 %v794
        %v862 = vpop.f32.mrb[0].mxu0
        %v863 = vadd.f32 0.0, %v862
        %v864 = vpop.f32.mrb[0].mxu0
        %865 = vdwg.mxu0
        %v866 = vpack.c.bf16 %v863, %v863
        %v867 = vld [vmem:[%s4] sm:$0xf]
        %v868 = vld [vmem:[%s4 + $0x4] sm:$0xf]
        %v869 = vld [vmem:[%s4 + $0x8] sm:$0xf]
        %v870 = vld [vmem:[%s4 + $0xc] sm:$0xf]
        %v871 = vld [vmem:[%s4 + $0x10] sm:$0x1]
        %v872 = vld [vmem:[#allocation10] sm:$0x1]
        %v874 = vlaneseq
        %v875 = vshrl.u32 %v874, 7
        %v876 = vsub.s32 0, %v875
        %v877 = vrot.slane %v872, %v876
        %v884 = vunpack.c.l.b16 %v867
        %v885 = vunpack.c.l.b16 %v868
        %v886 = vunpack.c.l.b16 %v869
        %v887 = vunpack.c.l.b16 %v870
        %v888 = vunpack.c.l.b16 %v871
        %v889 = vpack.c.b16 %v885, %v884
        %v890 = vpack.c.b16 %v887, %v886
        %v891 = vpack.c.b16 %v888, %v888
        %vm894 = vcmask 269312
        %v896 = vsel %vm894, %v866, 0
        %vm898 = vcmask 1040384
        %v899 = vsel 0, 4294967295, 65535
        %v900 = vsel %vm898, %v899, 0
        %v902 = vand.u32 %v891, %v900
        %904 = vmatprep.subr.bf16.mxu0 0
        %905 = vmatpush1.bf16.msra.mxu0 %v889
        %906 = vmatprep.subr.bf16.mxu0 0
        %907 = vmatpush1.bf16.msra.mxu0 %v890
        %908 = vmatprep.subr.bf16.mxu0 0
        %909 = vmatpush1.bf16.msra.mxu0 %v902
        %910 = vmatprep.subr.bf16.mxu0 0
        %911 = vmatpush1.bf16.msra.mxu0 0
        %912 = vmatprep.subr.bf16.mxu0 0
        %913 = vmatpush1.bf16.msra.mxu0 0
        %914 = vmatprep.subr.bf16.mxu0 0
        %915 = vmatpush1.bf16.msra.mxu0 0
        %916 = vmatprep.subr.bf16.mxu0 0
        %917 = vmatpush1.bf16.msra.mxu0 0
        %918 = vmatprep.subr.bf16.mxu0 0
        %919 = vmatpush1.bf16.msra.mxu0 0
        %920 = vmatprep.subr.bf16.mxu0 0
        %921 = vmatpush1.bf16.msra.mxu0 0
        %922 = vmatprep.subr.bf16.mxu0 0
        %923 = vmatpush1.bf16.msra.mxu0 0
        %924 = vmatprep.subr.bf16.mxu0 0
        %925 = vmatpush1.bf16.msra.mxu0 0
        %926 = vmatprep.subr.bf16.mxu0 0
        %927 = vmatpush1.bf16.msra.mxu0 0
        %928 = vmatprep.subr.bf16.mxu0 0
        %929 = vmatpush1.bf16.msra.mxu0 0
        %930 = vmatprep.subr.bf16.mxu0 0
        %931 = vmatpush1.bf16.msra.mxu0 0
        %932 = vmatprep.subr.bf16.mxu0 0
        %933 = vmatpush1.bf16.msra.mxu0 0
        %934 = vmatprep.subr.bf16.mxu0 0
        %935 = vmatpush1.bf16.msra.mxu0 0
        %936 = vmatprep.mubr.bf16.mxu0 0
        %937 = vmatmul.mubr.bf16.gmra.mrb[0].mxu0 %v896
        %v938 = vpop.f32.mrb[0].mxu0
        %v939 = vadd.f32 %v877, %v938
        %v940 = vpop.f32.mrb[0].mxu0
        %v941 = vpop.f32.mrb[0].mxu0
        %v942 = vpop.f32.mrb[0].mxu0
        %943 = vdwg.mxu0
        %v944 = vmax.f32 %v939, 0.0
        %v945 = vpack.c.bf16 %v944, %v944
        %v946 = vld [vmem:[%s6] sm:$0xf]
        %v947 = vld [vmem:[%s6 + $0x4] sm:$0xf]
        %v948 = vld [vmem:[%s6 + $0x8] sm:$0xf]
        %v949 = vld [vmem:[%s6 + $0xc] sm:$0xf]
        %v950 = vld [vmem:[%s6 + $0x10] sm:$0x1]
        %v951 = vld [vmem:[%s7] sm:$0x1]
        %v953 = vlaneseq
        %v954 = vshrl.u32 %v953, 7
        %v955 = vsub.s32 0, %v954
        %v956 = vrot.slane %v951, %v955
        %v963 = vunpack.c.l.b16 %v946
        %v964 = vunpack.c.l.b16 %v947
        %v965 = vunpack.c.l.b16 %v948
        %v966 = vunpack.c.l.b16 %v949
        %v967 = vunpack.c.l.b16 %v950
        %v968 = vpack.c.b16 %v964, %v963
        %v969 = vpack.c.b16 %v966, %v965
        %v970 = vpack.c.b16 %v967, %v967
        %v974 = vsel %vm894, %v945, 0
        %v977 = vand.u32 %v970, %v900
        %979 = vmatprep.subr.bf16.mxu0 0
        %980 = vmatpush1.bf16.msra.mxu0 %v968
        %981 = vmatprep.subr.bf16.mxu0 0
        %982 = vmatpush1.bf16.msra.mxu0 %v969
        %983 = vmatprep.subr.bf16.mxu0 0
        %984 = vmatpush1.bf16.msra.mxu0 %v977
        %985 = vmatprep.subr.bf16.mxu0 0
        %986 = vmatpush1.bf16.msra.mxu0 0
        %987 = vmatprep.subr.bf16.mxu0 0
        %988 = vmatpush1.bf16.msra.mxu0 0
        %989 = vmatprep.subr.bf16.mxu0 0
        %990 = vmatpush1.bf16.msra.mxu0 0
        %991 = vmatprep.subr.bf16.mxu0 0
        %992 = vmatpush1.bf16.msra.mxu0 0
        %993 = vmatprep.subr.bf16.mxu0 0
        %994 = vmatpush1.bf16.msra.mxu0 0
        %995 = vmatprep.subr.bf16.mxu0 0
        %996 = vmatpush1.bf16.msra.mxu0 0
        %997 = vmatprep.subr.bf16.mxu0 0
        %998 = vmatpush1.bf16.msra.mxu0 0
        %999 = vmatprep.subr.bf16.mxu0 0
        %1000 = vmatpush1.bf16.msra.mxu0 0
        %1001 = vmatprep.subr.bf16.mxu0 0
        %1002 = vmatpush1.bf16.msra.mxu0 0
        %1003 = vmatprep.subr.bf16.mxu0 0
        %1004 = vmatpush1.bf16.msra.mxu0 0
        %1005 = vmatprep.subr.bf16.mxu0 0
        %1006 = vmatpush1.bf16.msra.mxu0 0
        %1007 = vmatprep.subr.bf16.mxu0 0
        %1008 = vmatpush1.bf16.msra.mxu0 0
        %1009 = vmatprep.subr.bf16.mxu0 0
        %1010 = vmatpush1.bf16.msra.mxu0 0
        %1011 = vmatprep.mubr.bf16.mxu0 0
        %1012 = vmatmul.mubr.bf16.gmra.mrb[0].mxu0 %v974
        %v1013 = vpop.f32.mrb[0].mxu0
        %v1014 = vadd.f32 %v956, %v1013
        %v1015 = vpop.f32.mrb[0].mxu0
        %v1016 = vpop.f32.mrb[0].mxu0
        %v1017 = vpop.f32.mrb[0].mxu0
        %1018 = vdwg.mxu0
        %1019 = vst.msk [vmem:[%s428] sm:$0xff] %vm894, %v1014
        %v1020 = vld [vmem:[%s437] sm:$0xff]
        %v1021 = vsub.f32 1.0, %v1020
        %1023 = vset.pattern.permute.xlu0 0
        %1024 = vperm.xlu0 %1023, %v1021
        %v1025 = vpop.permute.xlu0 %1024
        %v1027 = vmul.f32 %v1025, %v1014
        %v1028 = vld [vmem:[%s378] sm:$0xff]
        %1030 = vset.pattern.permute.xlu0 0
        %1031 = vperm.xlu0 %1030, %v1020
        %v1032 = vpop.permute.xlu0 %1031
        %v1034 = vmul.f32 %v1032, %v1028
        %v1035 = vadd.f32 %v1027, %v1034
        %1036 = vst.msk [vmem:[%s421] sm:$0xff] %vm894, %v1035
        %s1037 = sand.u32 %s208, 1
        %s1038 = scalar_lea.sflag [#allocation7], %s1037
        %s1039 = sand.u32 %s208, 1
        %s1040 = smul.addr %s1039, 8
        %s1041 = scalar_lea.vmem [#allocation11], %s1040
        %s1042 = sand.u32 %s234, 1
        %s1043 = scalar_lea.sflag [#allocation13], %s1042
        %s1044 = sand.u32 %s234, 1
        %s1045 = smul.addr %s1044, 8
        %s1046 = scalar_lea.vmem [#allocation12], %s1045
        %p1047 = scmp.lt.s32.totalorder %s38, 1
        %s1048 = scalar_select %p1047, %s38, 1
        %s1049 = scalar_lea.vmem %s10, %s1048
        // Predicated region
        $region61: #{tpu_custom_call.1} parent=47 // pred_check
          %p1050 = pneg %p218
        $region62: #{tpu_custom_call.1} parent=47 // pred_check_branch
          %1052 = sbr.rel (%p1050) target = $region64
        $region63: #{tpu_custom_call.1} parent=47 // pred_region
          %s1054 = ssub.s32 128, 128
          %1055 = vsyncadd %s1038, %s1054
          %s1056 = smul.addr %s38, 128
          %s1057 = scalar_lea.hbm %s8, %s1056
          %s1059 = sshll.u32 %s1041, 4
          %s1060 = int_to_ptr.vmem [resolvable:$true] %s1059
          %1062 = dma.vmem_to_hbm [thread:$0]  %s1060, 128, %s1057, %s1038
        $region64: #{tpu_custom_call.1} parent=47 // pred_fallthru
          _
        // Predicated region
        $region65: #{tpu_custom_call.1} parent=47 // pred_check
          %p1063 = pneg %p244
        $region66: #{tpu_custom_call.1} parent=47 // pred_check_branch
          %1065 = sbr.rel (%p1063) target = $region68
        $region67: #{tpu_custom_call.1} parent=47 // pred_region
          %s1067 = ssub.s32 128, 128
          %1068 = vsyncadd %s1043, %s1067
          %s1069 = smul.addr %s38, 128
          %s1070 = scalar_lea.hbm %s9, %s1069
          %s1072 = sshll.u32 %s1046, 4
          %s1073 = int_to_ptr.vmem [resolvable:$true] %s1072
          %1075 = dma.vmem_to_hbm [thread:$0]  %s1073, 128, %s1070, %s1043
        $region68: #{tpu_custom_call.1} parent=47 // pred_fallthru
          _
        // Predicated region
        $region69: #{tpu_custom_call.1} parent=47 // pred_check
          %p1076 = pneg %p270
        $region70: #{tpu_custom_call.1} parent=47 // pred_check_branch
          %1078 = sbr.rel (%p1076) target = $region72
        $region71: #{tpu_custom_call.1} parent=47 // pred_region
          _
        $region72: #{tpu_custom_call.1} parent=47 // pred_fallthru
          _
      $region48: #{tpu_custom_call.1} parent=5 // pred_fallthru
        _
      %p1079 = scmp.le.s32.totalorder 2, %s33
      // Predicated region
      $region73: #{tpu_custom_call.1} parent=5 // pred_check
        %p1080 = pneg %p1079
      $region74: #{tpu_custom_call.1} parent=5 // pred_check_branch
        %1082 = sbr.rel (%p1080) target = $region76
      $region75: #{tpu_custom_call.1} parent=5 // pred_region
        %s1083 = ssub.s32 %s33, 2
        // Predicated region
        $region77: #{tpu_custom_call.1} parent=75 // pred_check
          %p1084 = pneg %p224
        $region78: #{tpu_custom_call.1} parent=75 // pred_check_branch
          %1086 = sbr.rel (%p1084) target = $region80
        $region79: #{tpu_custom_call.1} parent=75 // pred_region
          %s1087 = sand.u32 %s209, 1
          %s1088 = scalar_lea.sflag [#allocation7], %s1087
          %s1089 = sand.u32 %s209, 1
          %s1090 = smul.addr %s1089, 8
          %s1091 = scalar_lea.vmem [#allocation11], %s1090
          %1092 = dma.done %s1088, 128
        $region80: #{tpu_custom_call.1} parent=75 // pred_fallthru
          _
        // Predicated region
        $region81: #{tpu_custom_call.1} parent=75 // pred_check
          %p1093 = pneg %p250
        $region82: #{tpu_custom_call.1} parent=75 // pred_check_branch
          %1095 = sbr.rel (%p1093) target = $region84
        $region83: #{tpu_custom_call.1} parent=75 // pred_region
          %s1096 = sand.u32 %s235, 1
          %s1097 = scalar_lea.sflag [#allocation13], %s1096
          %s1098 = sand.u32 %s235, 1
          %s1099 = smul.addr %s1098, 8
          %s1100 = scalar_lea.vmem [#allocation12], %s1099
          %1101 = dma.done %s1097, 128
        $region84: #{tpu_custom_call.1} parent=75 // pred_fallthru
          _
        // Predicated region
        $region85: #{tpu_custom_call.1} parent=75 // pred_check
          %p1102 = pneg %p276
        $region86: #{tpu_custom_call.1} parent=75 // pred_check_branch
          %1104 = sbr.rel (%p1102) target = $region88
        $region87: #{tpu_custom_call.1} parent=75 // pred_region
          %p1105 = scmp.lt.s32.totalorder %s39, 1
          %s1106 = scalar_select %p1105, %s39, 1
          %s1107 = scalar_lea.vmem %s10, %s1106
        $region88: #{tpu_custom_call.1} parent=75 // pred_fallthru
          _
      $region76: #{tpu_custom_call.1} parent=5 // pred_fallthru
        _
    $region6: #{tpu_custom_call.1} parent=1 // loop_footer
      %s37 = sadd.s32 1, %s33
    $region7: #{tpu_custom_call.1} parent=1 // loop_footer_branch
      %32 = sbr.rel target = $region3
    $region8: #{tpu_custom_call.1} parent=1 // loop_exit
      _
    %1108 = vsyncpa [#allocation6], 1
    %s1109 = scalar_lea.sflag [#allocation6], 1
    %1110 = vsyncpa %s1109, 1
    %1111 = vsyncpa [#allocation9], 1
    %s1112 = scalar_lea.sflag [#allocation9], 1
    %1113 = vsyncpa %s1112, 1
    %1114 = vsyncpa [#allocation7], 1
    %s1115 = scalar_lea.sflag [#allocation7], 1
    %1116 = vsyncpa %s1115, 1
    %1117 = vsyncpa [#allocation13], 1
    %s1118 = scalar_lea.sflag [#allocation13], 1
    %1119 = vsyncpa %s1118, 1

</llo_original>
